<compile_context>
chip_gen: v6e
topology: v6e:2x2x1
jax: 0.10.0
libtpu: 0.0.40
codegen_flags: <defaults>
</compile_context>

<pallas_src>
import functools

import jax
import jax.numpy as jnp
from jax import lax
from jax.experimental import pallas as pl
from jax.experimental.pallas import tpu as pltpu

EPS = 1e-5  # nn.BatchNorm2d default eps


def _residual_layer_kernel(x_ref, band1_ref, band2_ref, spread_ref,
                           b1_ref, g1_ref, be1_ref,
                           b2_ref, g2_ref, be2_ref,
                           out_ref, *, N, H, W, Cin, Cout, K):
    """Fused: reflect-pad -> conv -> BN -> relu -> reflect-pad -> conv -> BN -> +x."""
    p = K // 2
    Wp = W + 2 * p
    NHW = N * H * W
    inv_nhw = 1.0 / float(NHW)

    x2 = x_ref[...]            # (N*H, W*Cin), lane-packed NHWC
    spread = spread_ref[...]   # (W*Cout, W*Cout) 0/1 channel-spread matrix

    def reflect_pad(v2, C):
        # v2: (N*H, W*C) -> (N, H+2p, (W+2p)*C), PyTorch ReflectionPad2d(p).
        v3 = v2.reshape(N, H, W * C)
        top = [v3[:, i:i + 1, :] for i in range(p, 0, -1)]
        bot = [v3[:, H - 1 - i:H - i, :] for i in range(1, p + 1)]
        vh = jnp.concatenate(top + [v3] + bot, axis=1)
        left = [vh[:, :, i * C:(i + 1) * C] for i in range(p, 0, -1)]
        right = [vh[:, :, (W - 1 - i) * C:(W - i) * C] for i in range(1, p + 1)]
        return jnp.concatenate(left + [vh] + right, axis=2)

    def conv_bn(v2, C, band_ref, b_row, g_row, be_row, relu):
        vp = reflect_pad(v2, C)                                  # (N, Hp, Wp*C)
        # Conv as K banded matmuls: acc[nh, w*Cout+co] = sum_{dh,dw,ci} ...
        acc = jnp.zeros((N * H, W * Cout), jnp.float32)
        for dh in range(K):
            lhs = vp[:, dh:dh + H, :].reshape(N * H, Wp * C)
            acc = acc + jnp.dot(lhs, band_ref[dh],
                                preferred_element_type=jnp.float32)
        acc = acc + b_row                                        # conv bias
        # BatchNorm2d training-mode stats (biased variance), per channel.
        col_sum = jnp.sum(acc, axis=0, keepdims=True)            # (1, W*Cout)
        mean_row = jnp.dot(col_sum, spread,
                           preferred_element_type=jnp.float32) * inv_nhw
        centered = acc - mean_row
        sq_sum = jnp.sum(centered * centered, axis=0, keepdims=True)
        var_row = jnp.dot(sq_sum, spread,
                          preferred_element_type=jnp.float32) * inv_nhw
        scale_row = lax.rsqrt(var_row + EPS) * g_row             # gamma/sqrt(var+eps)
        y = centered * scale_row + be_row
        return jnp.maximum(y, 0.0) if relu else y

    y1 = conv_bn(x2, Cin, band1_ref, b1_ref[...], g1_ref[...], be1_ref[...],
                 relu=True)
    y2 = conv_bn(y1, Cout, band2_ref, b2_ref[...], g2_ref[...], be2_ref[...],
                 relu=False)
    out_ref[...] = (y2 + x2).astype(out_ref.dtype)               # residual add


def _band_weights(w, W, p):
    """HWIO weights (K,K,Cin,Cout) -> (K, (W+2p)*Cin, W*Cout) banded matrices.

    band[dh, (w+dw)*Cin + ci, w*Cout + co] = w[dh, dw, ci, co]; a matmul of the
    width-padded row slab against band[dh] performs the conv over (dw, ci).
    """
    K, _, Cin, Cout = w.shape
    Wp = W + 2 * p
    eye = jnp.eye(W, dtype=w.dtype)
    shift = jnp.stack([jnp.pad(eye, ((dw, Wp - W - dw), (0, 0)))
                       for dw in range(K)])                      # (K, Wp, W)
    band = jnp.einsum('daw,hdio->haiwo', shift, w)               # (K,Wp,Cin,W,Cout)
    return band.reshape(K, Wp * Cin, W * Cout)


def _spread_matrix(W, C):
    """(W*C, W*C) 0/1 matrix: spread[a,b] = 1 iff a,b are the same channel."""
    ch = jnp.arange(W * C) % C
    return (ch[:, None] == ch[None, :]).astype(jnp.float32)


def residual_layer_forward(x_nchw, params, *, kernel_size):
    """Pallas implementation of ResidualLayer.forward (stride=1, pad='reflect',
    normalization='batch', training-mode BN)."""
    K = kernel_size
    p = K // 2
    N, C, H, W = x_nchw.shape
    Cout = params["w1"].shape[-1]
    assert Cout == C, "residual add requires in_ch == out_ch"

    # NCHW -> NHWC -> lane-packed (N*H, W*C)
    x2 = jnp.transpose(x_nchw, (0, 2, 3, 1)).reshape(N * H, W * C)
    x2 = x2.astype(jnp.float32)

    band1 = _band_weights(params["w1"], W, p)     # (K, Wp*C,   W*Cout)
    band2 = _band_weights(params["w2"], W, p)     # (K, Wp*Cout, W*Cout)
    spread = _spread_matrix(W, Cout)

    def tile_row(v):  # per-channel vector -> (1, W*Cout) matching lane packing
        return jnp.tile(v.reshape(1, Cout), (1, W)).astype(jnp.float32)

    inputs = [x2, band1, band2, spread,
              tile_row(params["b1"]), tile_row(params["g1"]), tile_row(params["be1"]),
              tile_row(params["b2"]), tile_row(params["g2"]), tile_row(params["be2"])]

    kernel = functools.partial(_residual_layer_kernel, N=N, H=H, W=W,
                               Cin=C, Cout=Cout, K=K)
    vmem = pl.BlockSpec(memory_space=pltpu.MemorySpace.VMEM)
    out2d = pl.pallas_call(
        kernel,
        out_shape=jax.ShapeDtypeStruct((N * H, W * Cout), jnp.float32),
        in_specs=[vmem] * len(inputs),
        out_specs=vmem,
    )(*inputs)

    out = out2d.reshape(N, H, W, Cout)
    return jnp.transpose(out, (0, 3, 1, 2))       # NHWC -> NCHW


def reference_forward(x_nchw, params, *, kernel_size):
    """Pure-JAX reference matching the PyTorch module semantics."""
    p = kernel_size // 2

    def conv_bn(xh, w, b, gamma, beta, relu):
        xp = jnp.pad(xh, ((0, 0), (p, p), (p, p), (0, 0)), mode="reflect")
        y = lax.conv_general_dilated(
            xp, w, window_strides=(1, 1), padding="VALID",
            dimension_numbers=("NHWC", "HWIO", "NHWC"))
        y = y + b.reshape(1, 1, 1, -1)
        mean = jnp.mean(y, axis=(0, 1, 2), keepdims=True)
        var = jnp.mean((y - mean) ** 2, axis=(0, 1, 2), keepdims=True)
        y = (y - mean) / jnp.sqrt(var + EPS)
        y = y * gamma.reshape(1, 1, 1, -1) + beta.reshape(1, 1, 1, -1)
        return jnp.maximum(y, 0.0) if relu else y

    x = jnp.transpose(x_nchw, (0, 2, 3, 1))
    y = conv_bn(x, params["w1"], params["b1"], params["g1"], params["be1"], True)
    z = conv_bn(y, params["w2"], params["b2"], params["g2"], params["be2"], False)
    return jnp.transpose(z + x, (0, 3, 1, 2))


def init_params(key, in_ch, out_ch, kernel_size):
    ks = jax.random.split(key, 8)
    def w_init(k, cin, cout):
        return 0.1 * jax.random.normal(k, (kernel_size, kernel_size, cin, cout),
                                       jnp.float32)
    return {
        "w1": w_init(ks[0], in_ch, out_ch),
        "b1": 0.1 * jax.random.normal(ks[1], (out_ch,), jnp.float32),
        "g1": 1.0 + 0.1 * jax.random.normal(ks[2], (out_ch,), jnp.float32),
        "be1": 0.1 * jax.random.normal(ks[3], (out_ch,), jnp.float32),
        "w2": w_init(ks[4], out_ch, out_ch),
        "b2": 0.1 * jax.random.normal(ks[5], (out_ch,), jnp.float32),
        "g2": 1.0 + 0.1 * jax.random.normal(ks[6], (out_ch,), jnp.float32),
        "be2": 0.1 * jax.random.normal(ks[7], (out_ch,), jnp.float32),
    }


if __name__ == "__main__":
    # ResidualLayer(in_ch=4, out_ch=4, kernel_size=3, stride=1,
    #               pad='reflect', normalization='batch')
    N, C, Hs, Ws, K = 2, 4, 16, 16, 3

    key = jax.random.PRNGKey(0)
    kx, kp = jax.random.split(key)
    x = jax.random.normal(kx, (N, C, Hs, Ws), jnp.float32)
    params = init_params(kp, C, C, K)

    fwd = jax.jit(functools.partial(residual_layer_forward, kernel_size=K))
    out = jax.block_until_ready(fwd(x, params))

    ref = jax.block_until_ready(reference_forward(x, params, kernel_size=K))
    assert out.shape == x.shape, (out.shape, x.shape)
    assert jnp.allclose(out, ref, rtol=2e-4, atol=1e-4), float(
        jnp.max(jnp.abs(out - ref)))

    print("KERNEL_OK")
</pallas_src>

<mosaic_0001>
module attributes {stable_mosaic.version = 11 : i64} {
  func.func @_residual_layer_kernel(%arg0: memref<32x64xf32, #tpu.memory_space<vmem>>, %arg1: memref<3x72x64xf32, #tpu.memory_space<vmem>>, %arg2: memref<3x72x64xf32, #tpu.memory_space<vmem>>, %arg3: memref<64x64xf32, #tpu.memory_space<vmem>>, %arg4: memref<1x64xf32, #tpu.memory_space<vmem>>, %arg5: memref<1x64xf32, #tpu.memory_space<vmem>>, %arg6: memref<1x64xf32, #tpu.memory_space<vmem>>, %arg7: memref<1x64xf32, #tpu.memory_space<vmem>>, %arg8: memref<1x64xf32, #tpu.memory_space<vmem>>, %arg9: memref<1x64xf32, #tpu.memory_space<vmem>>, %arg10: memref<32x64xf32, #tpu.memory_space<vmem>>) attributes {dimension_semantics = [], scalar_prefetch = 0 : i64, scratch_operands = 0 : i64, tpu.core_type = #tpu.core_type<tc>} {
    %c0 = arith.constant 0 : index
    %c0_0 = arith.constant 0 : index
    %0 = vector.load %arg0[%c0, %c0_0] : memref<32x64xf32, #tpu.memory_space<vmem>>, vector<32x64xf32>
    %c0_1 = arith.constant 0 : index
    %c0_2 = arith.constant 0 : index
    %1 = vector.load %arg3[%c0_1, %c0_2] : memref<64x64xf32, #tpu.memory_space<vmem>>, vector<64x64xf32>
    %c0_3 = arith.constant 0 : index
    %c0_4 = arith.constant 0 : index
    %2 = vector.load %arg4[%c0_3, %c0_4] : memref<1x64xf32, #tpu.memory_space<vmem>>, vector<1x64xf32>
    %c0_5 = arith.constant 0 : index
    %c0_6 = arith.constant 0 : index
    %3 = vector.load %arg5[%c0_5, %c0_6] : memref<1x64xf32, #tpu.memory_space<vmem>>, vector<1x64xf32>
    %c0_7 = arith.constant 0 : index
    %c0_8 = arith.constant 0 : index
    %4 = vector.load %arg6[%c0_7, %c0_8] : memref<1x64xf32, #tpu.memory_space<vmem>>, vector<1x64xf32>
    %5 = vector.shape_cast %0 : vector<32x64xf32> to vector<2x16x64xf32>
    %6 = vector.extract_strided_slice %5 {offsets = [0, 1, 0], sizes = [2, 1, 64], strides = [1, 1, 1]} : vector<2x16x64xf32> to vector<2x1x64xf32>
    %7 = vector.extract_strided_slice %5 {offsets = [0, 14, 0], sizes = [2, 1, 64], strides = [1, 1, 1]} : vector<2x16x64xf32> to vector<2x1x64xf32>
    %8 = tpu.concatenate %6, %5, %7 in 1 : vector<2x1x64xf32>, vector<2x16x64xf32>, vector<2x1x64xf32> -> vector<2x18x64xf32>
    %9 = vector.extract_strided_slice %8 {offsets = [0, 0, 4], sizes = [2, 18, 4], strides = [1, 1, 1]} : vector<2x18x64xf32> to vector<2x18x4xf32>
    %10 = vector.extract_strided_slice %8 {offsets = [0, 0, 56], sizes = [2, 18, 4], strides = [1, 1, 1]} : vector<2x18x64xf32> to vector<2x18x4xf32>
    %11 = tpu.concatenate %9, %8, %10 in 2 : vector<2x18x4xf32>, vector<2x18x64xf32>, vector<2x18x4xf32> -> vector<2x18x72xf32>
    %cst = arith.constant 0.000000e+00 : f32
    %12 = vector.broadcast %cst : f32 to vector<32x64xf32>
    %13 = vector.extract_strided_slice %11 {offsets = [0, 0, 0], sizes = [2, 16, 72], strides = [1, 1, 1]} : vector<2x18x72xf32> to vector<2x16x72xf32>
    %14 = vector.shape_cast %13 : vector<2x16x72xf32> to vector<32x72xf32>
    %c0_9 = arith.constant 0 : index
    %c0_10 = arith.constant 0 : index
    %c0_11 = arith.constant 0 : index
    %15 = vector.load %arg1[%c0_9, %c0_10, %c0_11] : memref<3x72x64xf32, #tpu.memory_space<vmem>>, vector<1x72x64xf32>
    %16 = vector.shape_cast %15 : vector<1x72x64xf32> to vector<72x64xf32>
    %cst_12 = arith.constant dense<0.000000e+00> : vector<32x64xf32>
    %17 = tpu.matmul %14, %16, %cst_12 {dimension_numbers = #tpu.dot_dimension_numbers<[1], [0], [0], [1], [0, 0, 1, 1], [], []>} : vector<32x72xf32>, vector<72x64xf32>, vector<32x64xf32> -> vector<32x64xf32>
    %18 = arith.addf %12, %17 : vector<32x64xf32>
    %19 = vector.extract_strided_slice %11 {offsets = [0, 1, 0], sizes = [2, 16, 72], strides = [1, 1, 1]} : vector<2x18x72xf32> to vector<2x16x72xf32>
    %20 = vector.shape_cast %19 : vector<2x16x72xf32> to vector<32x72xf32>
    %c1 = arith.constant 1 : index
    %c0_13 = arith.constant 0 : index
    %c0_14 = arith.constant 0 : index
    %21 = vector.load %arg1[%c1, %c0_13, %c0_14] : memref<3x72x64xf32, #tpu.memory_space<vmem>>, vector<1x72x64xf32>
    %22 = vector.shape_cast %21 : vector<1x72x64xf32> to vector<72x64xf32>
    %cst_15 = arith.constant dense<0.000000e+00> : vector<32x64xf32>
    %23 = tpu.matmul %20, %22, %cst_15 {dimension_numbers = #tpu.dot_dimension_numbers<[1], [0], [0], [1], [0, 0, 1, 1], [], []>} : vector<32x72xf32>, vector<72x64xf32>, vector<32x64xf32> -> vector<32x64xf32>
    %24 = arith.addf %18, %23 : vector<32x64xf32>
    %25 = vector.extract_strided_slice %11 {offsets = [0, 2, 0], sizes = [2, 16, 72], strides = [1, 1, 1]} : vector<2x18x72xf32> to vector<2x16x72xf32>
    %26 = vector.shape_cast %25 : vector<2x16x72xf32> to vector<32x72xf32>
    %c2 = arith.constant 2 : index
    %c0_16 = arith.constant 0 : index
    %c0_17 = arith.constant 0 : index
    %27 = vector.load %arg1[%c2, %c0_16, %c0_17] : memref<3x72x64xf32, #tpu.memory_space<vmem>>, vector<1x72x64xf32>
    %28 = vector.shape_cast %27 : vector<1x72x64xf32> to vector<72x64xf32>
    %cst_18 = arith.constant dense<0.000000e+00> : vector<32x64xf32>
    %29 = tpu.matmul %26, %28, %cst_18 {dimension_numbers = #tpu.dot_dimension_numbers<[1], [0], [0], [1], [0, 0, 1, 1], [], []>} : vector<32x72xf32>, vector<72x64xf32>, vector<32x64xf32> -> vector<32x64xf32>
    %30 = arith.addf %24, %29 : vector<32x64xf32>
    %31 = vector.broadcast %2 : vector<1x64xf32> to vector<32x64xf32>
    %32 = arith.addf %30, %31 : vector<32x64xf32>
    %cst_19 = arith.constant dense<0.000000e+00> : vector<64xf32>
    %33 = vector.multi_reduction <add>, %32, %cst_19 [0] : vector<32x64xf32> to vector<64xf32>
    %34 = vector.shape_cast %33 : vector<64xf32> to vector<1x64xf32>
    %cst_20 = arith.constant dense<0.000000e+00> : vector<1x64xf32>
    %35 = tpu.matmul %34, %1, %cst_20 {dimension_numbers = #tpu.dot_dimension_numbers<[1], [0], [0], [1], [0, 0, 1, 1], [], []>} : vector<1x64xf32>, vector<64x64xf32>, vector<1x64xf32> -> vector<1x64xf32>
    %cst_21 = arith.constant 0.001953125 : f32
    %36 = vector.broadcast %cst_21 : f32 to vector<1x64xf32>
    %37 = arith.mulf %35, %36 : vector<1x64xf32>
    %38 = vector.broadcast %37 : vector<1x64xf32> to vector<32x64xf32>
    %39 = arith.subf %32, %38 : vector<32x64xf32>
    %40 = arith.mulf %39, %39 : vector<32x64xf32>
    %cst_22 = arith.constant dense<0.000000e+00> : vector<64xf32>
    %41 = vector.multi_reduction <add>, %40, %cst_22 [0] : vector<32x64xf32> to vector<64xf32>
    %42 = vector.shape_cast %41 : vector<64xf32> to vector<1x64xf32>
    %cst_23 = arith.constant dense<0.000000e+00> : vector<1x64xf32>
    %43 = tpu.matmul %42, %1, %cst_23 {dimension_numbers = #tpu.dot_dimension_numbers<[1], [0], [0], [1], [0, 0, 1, 1], [], []>} : vector<1x64xf32>, vector<64x64xf32>, vector<1x64xf32> -> vector<1x64xf32>
    %cst_24 = arith.constant 0.001953125 : f32
    %44 = vector.broadcast %cst_24 : f32 to vector<1x64xf32>
    %45 = arith.mulf %43, %44 : vector<1x64xf32>
    %cst_25 = arith.constant 9.99999974E-6 : f32
    %46 = vector.broadcast %cst_25 : f32 to vector<1x64xf32>
    %47 = arith.addf %45, %46 : vector<1x64xf32>
    %48 = math.rsqrt %47 : vector<1x64xf32>
    %49 = arith.mulf %48, %3 : vector<1x64xf32>
    %50 = vector.broadcast %49 : vector<1x64xf32> to vector<32x64xf32>
    %51 = arith.mulf %39, %50 : vector<32x64xf32>
    %52 = vector.broadcast %4 : vector<1x64xf32> to vector<32x64xf32>
    %53 = arith.addf %51, %52 : vector<32x64xf32>
    %cst_26 = arith.constant 0.000000e+00 : f32
    %54 = vector.broadcast %cst_26 : f32 to vector<32x64xf32>
    %55 = arith.maximumf %53, %54 : vector<32x64xf32>
    %c0_27 = arith.constant 0 : index
    %c0_28 = arith.constant 0 : index
    %56 = vector.load %arg7[%c0_27, %c0_28] : memref<1x64xf32, #tpu.memory_space<vmem>>, vector<1x64xf32>
    %c0_29 = arith.constant 0 : index
    %c0_30 = arith.constant 0 : index
    %57 = vector.load %arg8[%c0_29, %c0_30] : memref<1x64xf32, #tpu.memory_space<vmem>>, vector<1x64xf32>
    %c0_31 = arith.constant 0 : index
    %c0_32 = arith.constant 0 : index
    %58 = vector.load %arg9[%c0_31, %c0_32] : memref<1x64xf32, #tpu.memory_space<vmem>>, vector<1x64xf32>
    %59 = vector.shape_cast %55 : vector<32x64xf32> to vector<2x16x64xf32>
    %60 = vector.extract_strided_slice %59 {offsets = [0, 1, 0], sizes = [2, 1, 64], strides = [1, 1, 1]} : vector<2x16x64xf32> to vector<2x1x64xf32>
    %61 = vector.extract_strided_slice %59 {offsets = [0, 14, 0], sizes = [2, 1, 64], strides = [1, 1, 1]} : vector<2x16x64xf32> to vector<2x1x64xf32>
    %62 = tpu.concatenate %60, %59, %61 in 1 : vector<2x1x64xf32>, vector<2x16x64xf32>, vector<2x1x64xf32> -> vector<2x18x64xf32>
    %63 = vector.extract_strided_slice %62 {offsets = [0, 0, 4], sizes = [2, 18, 4], strides = [1, 1, 1]} : vector<2x18x64xf32> to vector<2x18x4xf32>
    %64 = vector.extract_strided_slice %62 {offsets = [0, 0, 56], sizes = [2, 18, 4], strides = [1, 1, 1]} : vector<2x18x64xf32> to vector<2x18x4xf32>
    %65 = tpu.concatenate %63, %62, %64 in 2 : vector<2x18x4xf32>, vector<2x18x64xf32>, vector<2x18x4xf32> -> vector<2x18x72xf32>
    %cst_33 = arith.constant 0.000000e+00 : f32
    %66 = vector.broadcast %cst_33 : f32 to vector<32x64xf32>
    %67 = vector.extract_strided_slice %65 {offsets = [0, 0, 0], sizes = [2, 16, 72], strides = [1, 1, 1]} : vector<2x18x72xf32> to vector<2x16x72xf32>
    %68 = vector.shape_cast %67 : vector<2x16x72xf32> to vector<32x72xf32>
    %c0_34 = arith.constant 0 : index
    %c0_35 = arith.constant 0 : index
    %c0_36 = arith.constant 0 : index
    %69 = vector.load %arg2[%c0_34, %c0_35, %c0_36] : memref<3x72x64xf32, #tpu.memory_space<vmem>>, vector<1x72x64xf32>
    %70 = vector.shape_cast %69 : vector<1x72x64xf32> to vector<72x64xf32>
    %cst_37 = arith.constant dense<0.000000e+00> : vector<32x64xf32>
    %71 = tpu.matmul %68, %70, %cst_37 {dimension_numbers = #tpu.dot_dimension_numbers<[1], [0], [0], [1], [0, 0, 1, 1], [], []>} : vector<32x72xf32>, vector<72x64xf32>, vector<32x64xf32> -> vector<32x64xf32>
    %72 = arith.addf %66, %71 : vector<32x64xf32>
    %73 = vector.extract_strided_slice %65 {offsets = [0, 1, 0], sizes = [2, 16, 72], strides = [1, 1, 1]} : vector<2x18x72xf32> to vector<2x16x72xf32>
    %74 = vector.shape_cast %73 : vector<2x16x72xf32> to vector<32x72xf32>
    %c1_38 = arith.constant 1 : index
    %c0_39 = arith.constant 0 : index
    %c0_40 = arith.constant 0 : index
    %75 = vector.load %arg2[%c1_38, %c0_39, %c0_40] : memref<3x72x64xf32, #tpu.memory_space<vmem>>, vector<1x72x64xf32>
    %76 = vector.shape_cast %75 : vector<1x72x64xf32> to vector<72x64xf32>
    %cst_41 = arith.constant dense<0.000000e+00> : vector<32x64xf32>
    %77 = tpu.matmul %74, %76, %cst_41 {dimension_numbers = #tpu.dot_dimension_numbers<[1], [0], [0], [1], [0, 0, 1, 1], [], []>} : vector<32x72xf32>, vector<72x64xf32>, vector<32x64xf32> -> vector<32x64xf32>
    %78 = arith.addf %72, %77 : vector<32x64xf32>
    %79 = vector.extract_strided_slice %65 {offsets = [0, 2, 0], sizes = [2, 16, 72], strides = [1, 1, 1]} : vector<2x18x72xf32> to vector<2x16x72xf32>
    %80 = vector.shape_cast %79 : vector<2x16x72xf32> to vector<32x72xf32>
    %c2_42 = arith.constant 2 : index
    %c0_43 = arith.constant 0 : index
    %c0_44 = arith.constant 0 : index
    %81 = vector.load %arg2[%c2_42, %c0_43, %c0_44] : memref<3x72x64xf32, #tpu.memory_space<vmem>>, vector<1x72x64xf32>
    %82 = vector.shape_cast %81 : vector<1x72x64xf32> to vector<72x64xf32>
    %cst_45 = arith.constant dense<0.000000e+00> : vector<32x64xf32>
    %83 = tpu.matmul %80, %82, %cst_45 {dimension_numbers = #tpu.dot_dimension_numbers<[1], [0], [0], [1], [0, 0, 1, 1], [], []>} : vector<32x72xf32>, vector<72x64xf32>, vector<32x64xf32> -> vector<32x64xf32>
    %84 = arith.addf %78, %83 : vector<32x64xf32>
    %85 = vector.broadcast %56 : vector<1x64xf32> to vector<32x64xf32>
    %86 = arith.addf %84, %85 : vector<32x64xf32>
    %cst_46 = arith.constant dense<0.000000e+00> : vector<64xf32>
    %87 = vector.multi_reduction <add>, %86, %cst_46 [0] : vector<32x64xf32> to vector<64xf32>
    %88 = vector.shape_cast %87 : vector<64xf32> to vector<1x64xf32>
    %cst_47 = arith.constant dense<0.000000e+00> : vector<1x64xf32>
    %89 = tpu.matmul %88, %1, %cst_47 {dimension_numbers = #tpu.dot_dimension_numbers<[1], [0], [0], [1], [0, 0, 1, 1], [], []>} : vector<1x64xf32>, vector<64x64xf32>, vector<1x64xf32> -> vector<1x64xf32>
    %cst_48 = arith.constant 0.001953125 : f32
    %90 = vector.broadcast %cst_48 : f32 to vector<1x64xf32>
    %91 = arith.mulf %89, %90 : vector<1x64xf32>
    %92 = vector.broadcast %91 : vector<1x64xf32> to vector<32x64xf32>
    %93 = arith.subf %86, %92 : vector<32x64xf32>
    %94 = arith.mulf %93, %93 : vector<32x64xf32>
    %cst_49 = arith.constant dense<0.000000e+00> : vector<64xf32>
    %95 = vector.multi_reduction <add>, %94, %cst_49 [0] : vector<32x64xf32> to vector<64xf32>
    %96 = vector.shape_cast %95 : vector<64xf32> to vector<1x64xf32>
    %cst_50 = arith.constant dense<0.000000e+00> : vector<1x64xf32>
    %97 = tpu.matmul %96, %1, %cst_50 {dimension_numbers = #tpu.dot_dimension_numbers<[1], [0], [0], [1], [0, 0, 1, 1], [], []>} : vector<1x64xf32>, vector<64x64xf32>, vector<1x64xf32> -> vector<1x64xf32>
    %cst_51 = arith.constant 0.001953125 : f32
    %98 = vector.broadcast %cst_51 : f32 to vector<1x64xf32>
    %99 = arith.mulf %97, %98 : vector<1x64xf32>
    %cst_52 = arith.constant 9.99999974E-6 : f32
    %100 = vector.broadcast %cst_52 : f32 to vector<1x64xf32>
    %101 = arith.addf %99, %100 : vector<1x64xf32>
    %102 = math.rsqrt %101 : vector<1x64xf32>
    %103 = arith.mulf %102, %57 : vector<1x64xf32>
    %104 = vector.broadcast %103 : vector<1x64xf32> to vector<32x64xf32>
    %105 = arith.mulf %93, %104 : vector<32x64xf32>
    %106 = vector.broadcast %58 : vector<1x64xf32> to vector<32x64xf32>
    %107 = arith.addf %105, %106 : vector<32x64xf32>
    %108 = arith.addf %107, %0 : vector<32x64xf32>
    %c0_53 = arith.constant 0 : index
    %c0_54 = arith.constant 0 : index
    %109 = vector.load %arg10[%c0_53, %c0_54] : memref<32x64xf32, #tpu.memory_space<vmem>>, vector<32x64xf32>
    tpu.vector_store %arg10[%c0_53, %c0_54], %108 {strides = array<i32>} : memref<32x64xf32, #tpu.memory_space<vmem>>, vector<32x64xf32>,
    return
  }
}

</mosaic_0001>

<llo_original>
// kernel: residual_layer_forward.1
$region0: #{residual_layer_forward.1}
  #allocation0 [shape = 'u32[]', space=smem, size = 0x4, offset = 0x4, fixed_abs, tag = 'smem constant byte address 0x4 - core index']
  #allocation1 [shape = 'u32[144,128]{1,0:T(1,128)}', space=vmem, size = 0x12000, scoped, tag = 'internal scratch']
  %s0 = inlined_call_operand.vmem [shape: f32[32,64], index: 0, kind: input, shape index: {}]
  %s1 = inlined_call_operand.vmem [shape: f32[3,72,64], index: 1, kind: input, shape index: {}]
  %s2 = inlined_call_operand.vmem [shape: f32[3,72,64], index: 2, kind: input, shape index: {}]
  %s3 = inlined_call_operand.vmem [shape: f32[64,64], index: 3, kind: input, shape index: {}]
  %s4 = inlined_call_operand.vmem [shape: f32[1,64], index: 4, kind: input, shape index: {}]
  %s5 = inlined_call_operand.vmem [shape: f32[1,64], index: 5, kind: input, shape index: {}]
  %s6 = inlined_call_operand.vmem [shape: f32[1,64], index: 6, kind: input, shape index: {}]
  %s7 = inlined_call_operand.vmem [shape: f32[1,64], index: 7, kind: input, shape index: {}]
  %s8 = inlined_call_operand.vmem [shape: f32[1,64], index: 8, kind: input, shape index: {}]
  %s9 = inlined_call_operand.vmem [shape: f32[1,64], index: 9, kind: input, shape index: {}]
  %s10 = inlined_call_operand.vmem [shape: f32[32,64], index: 10, kind: output, shape index: {}]
  %s11 = sld [smem:[#allocation0]]
  $region50: #{residual_layer_forward.1} parent=0
    _
  %s13 = ssub.s32 1, %s11
  %s14 = scalar_select 0, %s13, %s11
  // Predicated region
  $region2: #{residual_layer_forward.1} parent=0 // pred_check
    _
  $region3: #{residual_layer_forward.1} parent=0 // pred_check_branch
    %16 = sbr.rel (0) target = $region5
  $region4: #{residual_layer_forward.1} parent=0 // pred_region
    _
  $region5: #{residual_layer_forward.1} parent=0 // pred_fallthru
    _
  // Predicated region
  $region6: #{residual_layer_forward.1} parent=0 // pred_check
    _
  $region7: #{residual_layer_forward.1} parent=0 // pred_check_branch
    %18 = sbr.rel (0) target = $region9
  $region8: #{residual_layer_forward.1} parent=0 // pred_region
    _
  $region9: #{residual_layer_forward.1} parent=0 // pred_fallthru
    _
  // Predicated region
  $region10: #{residual_layer_forward.1} parent=0 // pred_check
    _
  $region11: #{residual_layer_forward.1} parent=0 // pred_check_branch
    %20 = sbr.rel (0) target = $region13
  $region12: #{residual_layer_forward.1} parent=0 // pred_region
    _
  $region13: #{residual_layer_forward.1} parent=0 // pred_fallthru
    _
  // Predicated region
  $region14: #{residual_layer_forward.1} parent=0 // pred_check
    _
  $region15: #{residual_layer_forward.1} parent=0 // pred_check_branch
    %22 = sbr.rel (0) target = $region17
  $region16: #{residual_layer_forward.1} parent=0 // pred_region
    _
  $region17: #{residual_layer_forward.1} parent=0 // pred_fallthru
    _
  // Predicated region
  $region18: #{residual_layer_forward.1} parent=0 // pred_check
    _
  $region19: #{residual_layer_forward.1} parent=0 // pred_check_branch
    %24 = sbr.rel (0) target = $region21
  $region20: #{residual_layer_forward.1} parent=0 // pred_region
    _
  $region21: #{residual_layer_forward.1} parent=0 // pred_fallthru
    _
  // Predicated region
  $region22: #{residual_layer_forward.1} parent=0 // pred_check
    _
  $region23: #{residual_layer_forward.1} parent=0 // pred_check_branch
    %26 = sbr.rel (0) target = $region25
  $region24: #{residual_layer_forward.1} parent=0 // pred_region
    _
  $region25: #{residual_layer_forward.1} parent=0 // pred_fallthru
    _
  // Predicated region
  $region26: #{residual_layer_forward.1} parent=0 // pred_check
    _
  $region27: #{residual_layer_forward.1} parent=0 // pred_check_branch
    %28 = sbr.rel (0) target = $region29
  $region28: #{residual_layer_forward.1} parent=0 // pred_region
    _
  $region29: #{residual_layer_forward.1} parent=0 // pred_fallthru
    _
  // Predicated region
  $region30: #{residual_layer_forward.1} parent=0 // pred_check
    _
  $region31: #{residual_layer_forward.1} parent=0 // pred_check_branch
    %30 = sbr.rel (0) target = $region33
  $region32: #{residual_layer_forward.1} parent=0 // pred_region
    _
  $region33: #{residual_layer_forward.1} parent=0 // pred_fallthru
    _
  // Predicated region
  $region34: #{residual_layer_forward.1} parent=0 // pred_check
    _
  $region35: #{residual_layer_forward.1} parent=0 // pred_check_branch
    %32 = sbr.rel (0) target = $region37
  $region36: #{residual_layer_forward.1} parent=0 // pred_region
    _
  $region37: #{residual_layer_forward.1} parent=0 // pred_fallthru
    _
  // Predicated region
  $region38: #{residual_layer_forward.1} parent=0 // pred_check
    _
  $region39: #{residual_layer_forward.1} parent=0 // pred_check_branch
    %34 = sbr.rel (0) target = $region41
  $region40: #{residual_layer_forward.1} parent=0 // pred_region
    _
  $region41: #{residual_layer_forward.1} parent=0 // pred_fallthru
    _
  %v35 = vld [vmem:[%s0] sm:$0xff]
  %v36 = vld [vmem:[%s0 + $0x8] sm:$0xff]
  %v37 = vld [vmem:[%s0 + $0x10] sm:$0xff]
  %v38 = vld [vmem:[%s0 + $0x18] sm:$0xff]
  %v39 = vld [vmem:[%s3] sm:$0xff]
  %v40 = vld [vmem:[%s3 + $0x8] sm:$0xff]
  %v41 = vld [vmem:[%s3 + $0x10] sm:$0xff]
  %v42 = vld [vmem:[%s3 + $0x18] sm:$0xff]
  %v43 = vld [vmem:[%s3 + $0x20] sm:$0xff]
  %v44 = vld [vmem:[%s3 + $0x28] sm:$0xff]
  %v45 = vld [vmem:[%s3 + $0x30] sm:$0xff]
  %v46 = vld [vmem:[%s3 + $0x38] sm:$0xff]
  %v47 = vld [vmem:[%s4] sm:$0x1]
  %v48 = vld [vmem:[%s5] sm:$0x1]
  %v49 = vld [vmem:[%s6] sm:$0x1]
  %v52 = vrot.slane %v35, 1
  %v53 = vrot.slane %v37, 1
  %vm58 = vcmask 1040384
  %v59 = vrot.slane %v35, 7
  %v60 = vrot.slane %v36, 7
  %v61 = vsel %vm58, %v59, %v60
  %v62 = vrot.slane %v37, 7
  %v63 = vrot.slane %v38, 7
  %v64 = vsel %vm58, %v62, %v63
  %v69 = vrot.slane %v36, 5
  %v70 = vrot.slane %v38, 5
  %v73 = vsel %vm58, %v52, %v59
  %v74 = vsel %vm58, %v53, %v62
  %v75 = vsel %vm58, %v60, %v69
  %v76 = vsel %vm58, %v63, %v70
  %81 = vrot.lane.b32.xlu0 %v73, 124
  %v82 = vpop.permute.xlu0 %81
  %83 = vrot.lane.b32.xlu0 %v61, 124
  %v84 = vpop.permute.xlu0 %83
  %85 = vrot.lane.b32.xlu0 %v75, 124
  %v86 = vpop.permute.xlu0 %85
  %87 = vrot.lane.b32.xlu0 %v74, 124
  %v88 = vpop.permute.xlu0 %87
  %89 = vrot.lane.b32.xlu0 %v64, 124
  %v90 = vpop.permute.xlu0 %89
  %91 = vrot.lane.b32.xlu0 %v76, 124
  %v92 = vpop.permute.xlu0 %91
  %99 = vrot.lane.b32.xlu0 %v73, 4
  %v100 = vpop.permute.xlu0 %99
  %101 = vrot.lane.b32.xlu0 %v61, 4
  %v102 = vpop.permute.xlu0 %101
  %103 = vrot.lane.b32.xlu0 %v75, 4
  %v104 = vpop.permute.xlu0 %103
  %105 = vrot.lane.b32.xlu0 %v74, 4
  %v106 = vpop.permute.xlu0 %105
  %107 = vrot.lane.b32.xlu0 %v64, 4
  %v108 = vpop.permute.xlu0 %107
  %109 = vrot.lane.b32.xlu0 %v76, 4
  %v110 = vpop.permute.xlu0 %109
  %117 = vrot.lane.b32.xlu0 %v73, 12
  %v118 = vpop.permute.xlu0 %117
  %119 = vrot.lane.b32.xlu0 %v61, 12
  %v120 = vpop.permute.xlu0 %119
  %121 = vrot.lane.b32.xlu0 %v75, 12
  %v122 = vpop.permute.xlu0 %121
  %123 = vrot.lane.b32.xlu0 %v74, 12
  %v124 = vpop.permute.xlu0 %123
  %125 = vrot.lane.b32.xlu0 %v64, 12
  %v126 = vpop.permute.xlu0 %125
  %127 = vrot.lane.b32.xlu0 %v76, 12
  %v128 = vpop.permute.xlu0 %127
  %vm135 = vcmask 31744
  %v136 = vsel %vm135, %v82, %v100
  %v137 = vsel %vm135, %v84, %v102
  %v138 = vsel %vm135, %v86, %v104
  %v139 = vsel %vm135, %v88, %v106
  %v140 = vsel %vm135, %v90, %v108
  %v141 = vsel %vm135, %v92, %v110
  %vm142 = vcmask 556032
  %v143 = vsel %vm142, %v136, %v118
  %v144 = vsel %vm142, %v137, %v120
  %v145 = vsel %vm142, %v138, %v122
  %v146 = vsel %vm142, %v139, %v124
  %v147 = vsel %vm142, %v140, %v126
  %v148 = vsel %vm142, %v141, %v128
  %v149 = vld [vmem:[%s1] sm:$0xff]
  %v150 = vld [vmem:[%s1 + $0x8] sm:$0xff]
  %v151 = vld [vmem:[%s1 + $0x10] sm:$0xff]
  %v152 = vld [vmem:[%s1 + $0x18] sm:$0xff]
  %v153 = vld [vmem:[%s1 + $0x20] sm:$0xff]
  %v154 = vld [vmem:[%s1 + $0x28] sm:$0xff]
  %v155 = vld [vmem:[%s1 + $0x30] sm:$0xff]
  %v156 = vld [vmem:[%s1 + $0x38] sm:$0xff]
  %v157 = vld [vmem:[%s1 + $0x40] sm:$0xff]
  %vm164 = vcmask 1046528
  %v165 = vrot.slane %v143, 1
  %v166 = vrot.slane %v144, 1
  %v167 = vsel %vm164, %v165, %v166
  %v168 = vrot.slane %v145, 1
  %v169 = vsel %vm164, %v166, %v168
  %v170 = vrot.slane %v146, 1
  %v171 = vrot.slane %v147, 1
  %v172 = vsel %vm164, %v170, %v171
  %v173 = vrot.slane %v148, 1
  %v174 = vsel %vm164, %v171, %v173
  %s175 = scalar_lea.vmem %s1, 72
  %v176 = vld [vmem:[%s175] sm:$0xff]
  %v177 = vld [vmem:[%s175 + $0x8] sm:$0xff]
  %v178 = vld [vmem:[%s175 + $0x10] sm:$0xff]
  %v179 = vld [vmem:[%s175 + $0x18] sm:$0xff]
  %v180 = vld [vmem:[%s175 + $0x20] sm:$0xff]
  %v181 = vld [vmem:[%s175 + $0x28] sm:$0xff]
  %v182 = vld [vmem:[%s175 + $0x30] sm:$0xff]
  %v183 = vld [vmem:[%s175 + $0x38] sm:$0xff]
  %v184 = vld [vmem:[%s175 + $0x40] sm:$0xff]
  %vm185 = vcmask 588800
  %v186 = vsel %vm185, %v167, 0
  %v188 = vsel %vm185, %v169, 0
  %v190 = vsel %vm185, %v172, 0
  %v192 = vsel %vm185, %v174, 0
  %194 = vmatprep.subr.mxu0 0.0
  %195 = vmatpush1.msra.mxu0 0.0
  %196 = vmatprep.subr.mxu0 0.0
  %197 = vmatpush1.msra.mxu0 0.0
  %198 = vmatprep.subr.mxu0 0.0
  %199 = vmatpush1.msra.mxu0 0.0
  %200 = vmatprep.subr.mxu0 0.0
  %201 = vmatpush1.msra.mxu0 0.0
  %202 = vmatprep.subr.mxu0 0.0
  %203 = vmatpush1.msra.mxu0 0.0
  %204 = vmatprep.subr.mxu0 0.0
  %205 = vmatpush1.msra.mxu0 0.0
  %206 = vmatprep.subr.mxu0 0.0
  %207 = vmatpush1.msra.mxu0 0.0
  %208 = vmatprep.subr.mxu0 0.0
  %209 = vmatpush1.msra.mxu0 %v184
  %210 = vmatprep.subr.mxu0 0.0
  %211 = vmatpush1.msra.mxu0 %v183
  %212 = vmatprep.subr.mxu0 0.0
  %213 = vmatpush1.msra.mxu0 %v182
  %214 = vmatprep.subr.mxu0 0.0
  %215 = vmatpush1.msra.mxu0 %v181
  %216 = vmatprep.subr.mxu0 0.0
  %217 = vmatpush1.msra.mxu0 %v180
  %218 = vmatprep.subr.mxu0 0.0
  %219 = vmatpush1.msra.mxu0 %v179
  %220 = vmatprep.subr.mxu0 0.0
  %221 = vmatpush1.msra.mxu0 %v178
  %222 = vmatprep.subr.mxu0 0.0
  %223 = vmatpush1.msra.mxu0 %v177
  %224 = vmatprep.subr.mxu0 0.0
  %225 = vmatpush1.msra.mxu0 %v176
  %226 = vmatprep.subr.mxu0 0.0
  %227 = vmatpush2.msra.mxu0 0.0
  %228 = vmatprep.subr.mxu0 0.0
  %229 = vmatpush2.msra.mxu0 0.0
  %230 = vmatprep.subr.mxu0 0.0
  %231 = vmatpush2.msra.mxu0 0.0
  %232 = vmatprep.subr.mxu0 0.0
  %233 = vmatpush2.msra.mxu0 0.0
  %234 = vmatprep.subr.mxu0 0.0
  %235 = vmatpush2.msra.mxu0 0.0
  %236 = vmatprep.subr.mxu0 0.0
  %237 = vmatpush2.msra.mxu0 0.0
  %238 = vmatprep.subr.mxu0 0.0
  %239 = vmatpush2.msra.mxu0 0.0
  %240 = vmatprep.subr.mxu0 0.0
  %241 = vmatpush2.msra.mxu0 0.0
  %242 = vmatprep.subr.mxu0 0.0
  %243 = vmatpush2.msra.mxu0 0.0
  %244 = vmatprep.subr.mxu0 0.0
  %245 = vmatpush2.msra.mxu0 0.0
  %246 = vmatprep.subr.mxu0 0.0
  %247 = vmatpush2.msra.mxu0 0.0
  %248 = vmatprep.subr.mxu0 0.0
  %249 = vmatpush2.msra.mxu0 0.0
  %250 = vmatprep.subr.mxu0 0.0
  %251 = vmatpush2.msra.mxu0 0.0
  %252 = vmatprep.subr.mxu0 0.0
  %253 = vmatpush2.msra.mxu0 0.0
  %254 = vmatprep.subr.mxu0 0.0
  %255 = vmatpush2.msra.mxu0 0.0
  %256 = vmatprep.subr.mxu0 0.0
  %257 = vmatpush2.msra.mxu0 0.0
  %258 = vmatprep.mubr.f32.mxu0 0.0
  %259 = vmatmul.mubr.f32.gmra.mxu0 %v186
  %v260 = vpop.f32.mrf.mxu0
  %v261 = vadd.f32 0.0, %v260
  %v262 = vpop.f32.mrf.mxu0
  %263 = vmatprep.mubr.f32.mxu0 0.0
  %264 = vmatmul.mubr.f32.gmra.mxu0 %v188
  %v265 = vpop.f32.mrf.mxu0
  %v266 = vadd.f32 0.0, %v265
  %v267 = vpop.f32.mrf.mxu0
  %268 = vmatprep.mubr.f32.mxu0 0.0
  %269 = vmatmul.mubr.f32.gmra.mxu0 %v190
  %v270 = vpop.f32.mrf.mxu0
  %v271 = vadd.f32 0.0, %v270
  %v272 = vpop.f32.mrf.mxu0
  %273 = vmatprep.mubr.f32.mxu0 0.0
  %274 = vmatmul.mubr.f32.gmra.mxu0 %v192
  %v275 = vpop.f32.mrf.mxu0
  %v276 = vadd.f32 0.0, %v275
  %v277 = vpop.f32.mrf.mxu0
  %278 = vdwg.mxu0
  %v279 = vsel %vm185, %v143, 0
  %v281 = vsel %vm185, %v144, 0
  %v283 = vsel %vm185, %v146, 0
  %v285 = vsel %vm185, %v147, 0
  %287 = vmatprep.subr.mxu0 0.0
  %288 = vmatpush1.msra.mxu0 0.0
  %289 = vmatprep.subr.mxu0 0.0
  %290 = vmatpush1.msra.mxu0 0.0
  %291 = vmatprep.subr.mxu0 0.0
  %292 = vmatpush1.msra.mxu0 0.0
  %293 = vmatprep.subr.mxu0 0.0
  %294 = vmatpush1.msra.mxu0 0.0
  %295 = vmatprep.subr.mxu0 0.0
  %296 = vmatpush1.msra.mxu0 0.0
  %297 = vmatprep.subr.mxu0 0.0
  %298 = vmatpush1.msra.mxu0 0.0
  %299 = vmatprep.subr.mxu0 0.0
  %300 = vmatpush1.msra.mxu0 0.0
  %301 = vmatprep.subr.mxu0 0.0
  %302 = vmatpush1.msra.mxu0 %v157
  %303 = vmatprep.subr.mxu0 0.0
  %304 = vmatpush1.msra.mxu0 %v156
  %305 = vmatprep.subr.mxu0 0.0
  %306 = vmatpush1.msra.mxu0 %v155
  %307 = vmatprep.subr.mxu0 0.0
  %308 = vmatpush1.msra.mxu0 %v154
  %309 = vmatprep.subr.mxu0 0.0
  %310 = vmatpush1.msra.mxu0 %v153
  %311 = vmatprep.subr.mxu0 0.0
  %312 = vmatpush1.msra.mxu0 %v152
  %313 = vmatprep.subr.mxu0 0.0
  %314 = vmatpush1.msra.mxu0 %v151
  %315 = vmatprep.subr.mxu0 0.0
  %316 = vmatpush1.msra.mxu0 %v150
  %317 = vmatprep.subr.mxu0 0.0
  %318 = vmatpush1.msra.mxu0 %v149
  %319 = vmatprep.subr.mxu0 0.0
  %320 = vmatpush2.msra.mxu0 0.0
  %321 = vmatprep.subr.mxu0 0.0
  %322 = vmatpush2.msra.mxu0 0.0
  %323 = vmatprep.subr.mxu0 0.0
  %324 = vmatpush2.msra.mxu0 0.0
  %325 = vmatprep.subr.mxu0 0.0
  %326 = vmatpush2.msra.mxu0 0.0
  %327 = vmatprep.subr.mxu0 0.0
  %328 = vmatpush2.msra.mxu0 0.0
  %329 = vmatprep.subr.mxu0 0.0
  %330 = vmatpush2.msra.mxu0 0.0
  %331 = vmatprep.subr.mxu0 0.0
  %332 = vmatpush2.msra.mxu0 0.0
  %333 = vmatprep.subr.mxu0 0.0
  %334 = vmatpush2.msra.mxu0 0.0
  %335 = vmatprep.subr.mxu0 0.0
  %336 = vmatpush2.msra.mxu0 0.0
  %337 = vmatprep.subr.mxu0 0.0
  %338 = vmatpush2.msra.mxu0 0.0
  %339 = vmatprep.subr.mxu0 0.0
  %340 = vmatpush2.msra.mxu0 0.0
  %341 = vmatprep.subr.mxu0 0.0
  %342 = vmatpush2.msra.mxu0 0.0
  %343 = vmatprep.subr.mxu0 0.0
  %344 = vmatpush2.msra.mxu0 0.0
  %345 = vmatprep.subr.mxu0 0.0
  %346 = vmatpush2.msra.mxu0 0.0
  %347 = vmatprep.subr.mxu0 0.0
  %348 = vmatpush2.msra.mxu0 0.0
  %349 = vmatprep.subr.mxu0 0.0
  %350 = vmatpush2.msra.mxu0 0.0
  %351 = vmatprep.mubr.f32.mxu0 0.0
  %352 = vmatmul.mubr.f32.gmra.mxu0 %v279
  %v353 = vpop.f32.mrf.mxu0
  %v354 = vadd.f32 %v261, %v353
  %v355 = vpop.f32.mrf.mxu0
  %356 = vmatprep.mubr.f32.mxu0 0.0
  %357 = vmatmul.mubr.f32.gmra.mxu0 %v281
  %v358 = vpop.f32.mrf.mxu0
  %v359 = vadd.f32 %v266, %v358
  %v360 = vpop.f32.mrf.mxu0
  %361 = vmatprep.mubr.f32.mxu0 0.0
  %362 = vmatmul.mubr.f32.gmra.mxu0 %v283
  %v363 = vpop.f32.mrf.mxu0
  %v364 = vadd.f32 %v271, %v363
  %v365 = vpop.f32.mrf.mxu0
  %366 = vmatprep.mubr.f32.mxu0 0.0
  %367 = vmatmul.mubr.f32.gmra.mxu0 %v285
  %v368 = vpop.f32.mrf.mxu0
  %v369 = vadd.f32 %v276, %v368
  %v370 = vpop.f32.mrf.mxu0
  %371 = vdwg.mxu0
  %vm372 = vcmask 1045504
  %v373 = vrot.slane %v143, 2
  %v374 = vrot.slane %v144, 2
  %v375 = vsel %vm372, %v373, %v374
  %v376 = vrot.slane %v145, 2
  %v377 = vsel %vm372, %v374, %v376
  %v378 = vrot.slane %v146, 2
  %v379 = vrot.slane %v147, 2
  %v380 = vsel %vm372, %v378, %v379
  %v381 = vrot.slane %v148, 2
  %v382 = vsel %vm372, %v379, %v381
  %s383 = scalar_lea.vmem %s1, 144
  %v384 = vld [vmem:[%s383] sm:$0xff]
  %v385 = vld [vmem:[%s383 + $0x8] sm:$0xff]
  %v386 = vld [vmem:[%s383 + $0x10] sm:$0xff]
  %v387 = vld [vmem:[%s383 + $0x18] sm:$0xff]
  %v388 = vld [vmem:[%s383 + $0x20] sm:$0xff]
  %v389 = vld [vmem:[%s383 + $0x28] sm:$0xff]
  %v390 = vld [vmem:[%s383 + $0x30] sm:$0xff]
  %v391 = vld [vmem:[%s383 + $0x38] sm:$0xff]
  %v392 = vld [vmem:[%s383 + $0x40] sm:$0xff]
  %v393 = vsel %vm185, %v375, 0
  %v395 = vsel %vm185, %v377, 0
  %v397 = vsel %vm185, %v380, 0
  %v399 = vsel %vm185, %v382, 0
  %401 = vmatprep.subr.mxu0 0.0
  %402 = vmatpush1.msra.mxu0 0.0
  %403 = vmatprep.subr.mxu0 0.0
  %404 = vmatpush1.msra.mxu0 0.0
  %405 = vmatprep.subr.mxu0 0.0
  %406 = vmatpush1.msra.mxu0 0.0
  %407 = vmatprep.subr.mxu0 0.0
  %408 = vmatpush1.msra.mxu0 0.0
  %409 = vmatprep.subr.mxu0 0.0
  %410 = vmatpush1.msra.mxu0 0.0
  %411 = vmatprep.subr.mxu0 0.0
  %412 = vmatpush1.msra.mxu0 0.0
  %413 = vmatprep.subr.mxu0 0.0
  %414 = vmatpush1.msra.mxu0 0.0
  %415 = vmatprep.subr.mxu0 0.0
  %416 = vmatpush1.msra.mxu0 %v392
  %417 = vmatprep.subr.mxu0 0.0
  %418 = vmatpush1.msra.mxu0 %v391
  %419 = vmatprep.subr.mxu0 0.0
  %420 = vmatpush1.msra.mxu0 %v390
  %421 = vmatprep.subr.mxu0 0.0
  %422 = vmatpush1.msra.mxu0 %v389
  %423 = vmatprep.subr.mxu0 0.0
  %424 = vmatpush1.msra.mxu0 %v388
  %425 = vmatprep.subr.mxu0 0.0
  %426 = vmatpush1.msra.mxu0 %v387
  %427 = vmatprep.subr.mxu0 0.0
  %428 = vmatpush1.msra.mxu0 %v386
  %429 = vmatprep.subr.mxu0 0.0
  %430 = vmatpush1.msra.mxu0 %v385
  %431 = vmatprep.subr.mxu0 0.0
  %432 = vmatpush1.msra.mxu0 %v384
  %433 = vmatprep.subr.mxu0 0.0
  %434 = vmatpush2.msra.mxu0 0.0
  %435 = vmatprep.subr.mxu0 0.0
  %436 = vmatpush2.msra.mxu0 0.0
  %437 = vmatprep.subr.mxu0 0.0
  %438 = vmatpush2.msra.mxu0 0.0
  %439 = vmatprep.subr.mxu0 0.0
  %440 = vmatpush2.msra.mxu0 0.0
  %441 = vmatprep.subr.mxu0 0.0
  %442 = vmatpush2.msra.mxu0 0.0
  %443 = vmatprep.subr.mxu0 0.0
  %444 = vmatpush2.msra.mxu0 0.0
  %445 = vmatprep.subr.mxu0 0.0
  %446 = vmatpush2.msra.mxu0 0.0
  %447 = vmatprep.subr.mxu0 0.0
  %448 = vmatpush2.msra.mxu0 0.0
  %449 = vmatprep.subr.mxu0 0.0
  %450 = vmatpush2.msra.mxu0 0.0
  %451 = vmatprep.subr.mxu0 0.0
  %452 = vmatpush2.msra.mxu0 0.0
  %453 = vmatprep.subr.mxu0 0.0
  %454 = vmatpush2.msra.mxu0 0.0
  %455 = vmatprep.subr.mxu0 0.0
  %456 = vmatpush2.msra.mxu0 0.0
  %457 = vmatprep.subr.mxu0 0.0
  %458 = vmatpush2.msra.mxu0 0.0
  %459 = vmatprep.subr.mxu0 0.0
  %460 = vmatpush2.msra.mxu0 0.0
  %461 = vmatprep.subr.mxu0 0.0
  %462 = vmatpush2.msra.mxu0 0.0
  %463 = vmatprep.subr.mxu0 0.0
  %464 = vmatpush2.msra.mxu0 0.0
  %465 = vmatprep.mubr.f32.mxu0 0.0
  %466 = vmatmul.mubr.f32.gmra.mxu0 %v393
  %v467 = vpop.f32.mrf.mxu0
  %v468 = vadd.f32 0.0, %v467
  %v469 = vpop.f32.mrf.mxu0
  %470 = vmatprep.mubr.f32.mxu0 0.0
  %471 = vmatmul.mubr.f32.gmra.mxu0 %v395
  %v472 = vpop.f32.mrf.mxu0
  %v473 = vadd.f32 0.0, %v472
  %v474 = vpop.f32.mrf.mxu0
  %475 = vmatprep.mubr.f32.mxu0 0.0
  %476 = vmatmul.mubr.f32.gmra.mxu0 %v397
  %v477 = vpop.f32.mrf.mxu0
  %v478 = vadd.f32 0.0, %v477
  %v479 = vpop.f32.mrf.mxu0
  %480 = vmatprep.mubr.f32.mxu0 0.0
  %481 = vmatmul.mubr.f32.gmra.mxu0 %v399
  %v482 = vpop.f32.mrf.mxu0
  %v483 = vadd.f32 0.0, %v482
  %v484 = vpop.f32.mrf.mxu0
  %485 = vdwg.mxu0
  %v486 = vadd.f32 %v354, %v468
  %v487 = vadd.f32 %v359, %v473
  %v488 = vadd.f32 %v364, %v478
  %v489 = vadd.f32 %v369, %v483
  %v491 = vlaneseq
  %v492 = vshrl.u32 %v491, 7
  %v493 = vsub.s32 0, %v492
  %v494 = vrot.slane %v47, %v493
  %v496 = vadd.f32 %v486, %v494
  %v497 = vadd.f32 %v487, %v494
  %v498 = vadd.f32 %v488, %v494
  %v499 = vadd.f32 %v489, %v494
  %vm500 = vcmask 523264
  %v501 = vsel %vm500, %v496, 0.0
  %v502 = vsel %vm500, %v497, 0.0
  %v503 = vadd.f32 %v501, %v502
  %v504 = vsel %vm500, %v498, 0.0
  %v505 = vadd.f32 %v503, %v504
  %v506 = vsel %vm500, %v499, 0.0
  %v507 = vadd.f32 %v505, %v506
  %v508 = vrot.slane %v507, 4
  %v509 = vadd.f32 %v507, %v508
  %v510 = vrot.slane %v509, 2
  %v511 = vadd.f32 %v509, %v510
  %v512 = vrot.slane %v511, 1
  %v513 = vadd.f32 %v511, %v512
  %v515 = vsel %vm500, %v513, 0
  %517 = vmatprep.subr.mxu0 0.0
  %518 = vmatpush1.msra.mxu0 0.0
  %519 = vmatprep.subr.mxu0 0.0
  %520 = vmatpush1.msra.mxu0 0.0
  %521 = vmatprep.subr.mxu0 0.0
  %522 = vmatpush1.msra.mxu0 0.0
  %523 = vmatprep.subr.mxu0 0.0
  %524 = vmatpush1.msra.mxu0 0.0
  %525 = vmatprep.subr.mxu0 0.0
  %526 = vmatpush1.msra.mxu0 0.0
  %527 = vmatprep.subr.mxu0 0.0
  %528 = vmatpush1.msra.mxu0 0.0
  %529 = vmatprep.subr.mxu0 0.0
  %530 = vmatpush1.msra.mxu0 0.0
  %531 = vmatprep.subr.mxu0 0.0
  %532 = vmatpush1.msra.mxu0 0.0
  %533 = vmatprep.subr.mxu0 0.0
  %534 = vmatpush1.msra.mxu0 %v46
  %535 = vmatprep.subr.mxu0 0.0
  %536 = vmatpush1.msra.mxu0 %v45
  %537 = vmatprep.subr.mxu0 0.0
  %538 = vmatpush1.msra.mxu0 %v44
  %539 = vmatprep.subr.mxu0 0.0
  %540 = vmatpush1.msra.mxu0 %v43
  %541 = vmatprep.subr.mxu0 0.0
  %542 = vmatpush1.msra.mxu0 %v42
  %543 = vmatprep.subr.mxu0 0.0
  %544 = vmatpush1.msra.mxu0 %v41
  %545 = vmatprep.subr.mxu0 0.0
  %546 = vmatpush1.msra.mxu0 %v40
  %547 = vmatprep.subr.mxu0 0.0
  %548 = vmatpush1.msra.mxu0 %v39
  %549 = vmatprep.subr.mxu0 0.0
  %550 = vmatpush2.msra.mxu0 0.0
  %551 = vmatprep.subr.mxu0 0.0
  %552 = vmatpush2.msra.mxu0 0.0
  %553 = vmatprep.subr.mxu0 0.0
  %554 = vmatpush2.msra.mxu0 0.0
  %555 = vmatprep.subr.mxu0 0.0
  %556 = vmatpush2.msra.mxu0 0.0
  %557 = vmatprep.subr.mxu0 0.0
  %558 = vmatpush2.msra.mxu0 0.0
  %559 = vmatprep.subr.mxu0 0.0
  %560 = vmatpush2.msra.mxu0 0.0
  %561 = vmatprep.subr.mxu0 0.0
  %562 = vmatpush2.msra.mxu0 0.0
  %563 = vmatprep.subr.mxu0 0.0
  %564 = vmatpush2.msra.mxu0 0.0
  %565 = vmatprep.subr.mxu0 0.0
  %566 = vmatpush2.msra.mxu0 0.0
  %567 = vmatprep.subr.mxu0 0.0
  %568 = vmatpush2.msra.mxu0 0.0
  %569 = vmatprep.subr.mxu0 0.0
  %570 = vmatpush2.msra.mxu0 0.0
  %571 = vmatprep.subr.mxu0 0.0
  %572 = vmatpush2.msra.mxu0 0.0
  %573 = vmatprep.subr.mxu0 0.0
  %574 = vmatpush2.msra.mxu0 0.0
  %575 = vmatprep.subr.mxu0 0.0
  %576 = vmatpush2.msra.mxu0 0.0
  %577 = vmatprep.subr.mxu0 0.0
  %578 = vmatpush2.msra.mxu0 0.0
  %579 = vmatprep.subr.mxu0 0.0
  %580 = vmatpush2.msra.mxu0 0.0
  %581 = vmatprep.mubr.f32.mxu0 0.0
  %582 = vmatmul.mubr.f32.gmra.mxu0 %v515
  %v583 = vpop.f32.mrf.mxu0
  %v584 = vadd.f32 0.0, %v583
  %v585 = vpop.f32.mrf.mxu0
  %586 = vdwg.mxu0
  %v587 = vmul.f32 %v584, 0.001953125
  %v588 = vlaneseq
  %v589 = vshrl.u32 %v588, 7
  %v590 = vsub.s32 0, %v589
  %v591 = vrot.slane %v587, %v590
  %v592 = vsub.f32 %v496, %v591
  %v593 = vsub.f32 %v497, %v591
  %v594 = vsub.f32 %v498, %v591
  %v595 = vsub.f32 %v499, %v591
  %v596 = vmul.f32 %v592, %v592
  %v597 = vmul.f32 %v593, %v593
  %v598 = vmul.f32 %v594, %v594
  %v599 = vmul.f32 %v595, %v595
  %v600 = vsel %vm500, %v596, 0.0
  %v601 = vsel %vm500, %v597, 0.0
  %v602 = vadd.f32 %v600, %v601
  %v603 = vsel %vm500, %v598, 0.0
  %v604 = vadd.f32 %v602, %v603
  %v605 = vsel %vm500, %v599, 0.0
  %v606 = vadd.f32 %v604, %v605
  %v607 = vrot.slane %v606, 4
  %v608 = vadd.f32 %v606, %v607
  %v609 = vrot.slane %v608, 2
  %v610 = vadd.f32 %v608, %v609
  %v611 = vrot.slane %v610, 1
  %v612 = vadd.f32 %v610, %v611
  %v614 = vsel %vm500, %v612, 0
  %616 = vmatprep.subr.mxu0 0.0
  %617 = vmatpush1.msra.mxu0 0.0
  %618 = vmatprep.subr.mxu0 0.0
  %619 = vmatpush1.msra.mxu0 0.0
  %620 = vmatprep.subr.mxu0 0.0
  %621 = vmatpush1.msra.mxu0 0.0
  %622 = vmatprep.subr.mxu0 0.0
  %623 = vmatpush1.msra.mxu0 0.0
  %624 = vmatprep.subr.mxu0 0.0
  %625 = vmatpush1.msra.mxu0 0.0
  %626 = vmatprep.subr.mxu0 0.0
  %627 = vmatpush1.msra.mxu0 0.0
  %628 = vmatprep.subr.mxu0 0.0
  %629 = vmatpush1.msra.mxu0 0.0
  %630 = vmatprep.subr.mxu0 0.0
  %631 = vmatpush1.msra.mxu0 0.0
  %632 = vmatprep.subr.mxu0 0.0
  %633 = vmatpush1.msra.mxu0 %v46
  %634 = vmatprep.subr.mxu0 0.0
  %635 = vmatpush1.msra.mxu0 %v45
  %636 = vmatprep.subr.mxu0 0.0
  %637 = vmatpush1.msra.mxu0 %v44
  %638 = vmatprep.subr.mxu0 0.0
  %639 = vmatpush1.msra.mxu0 %v43
  %640 = vmatprep.subr.mxu0 0.0
  %641 = vmatpush1.msra.mxu0 %v42
  %642 = vmatprep.subr.mxu0 0.0
  %643 = vmatpush1.msra.mxu0 %v41
  %644 = vmatprep.subr.mxu0 0.0
  %645 = vmatpush1.msra.mxu0 %v40
  %646 = vmatprep.subr.mxu0 0.0
  %647 = vmatpush1.msra.mxu0 %v39
  %648 = vmatprep.subr.mxu0 0.0
  %649 = vmatpush2.msra.mxu0 0.0
  %650 = vmatprep.subr.mxu0 0.0
  %651 = vmatpush2.msra.mxu0 0.0
  %652 = vmatprep.subr.mxu0 0.0
  %653 = vmatpush2.msra.mxu0 0.0
  %654 = vmatprep.subr.mxu0 0.0
  %655 = vmatpush2.msra.mxu0 0.0
  %656 = vmatprep.subr.mxu0 0.0
  %657 = vmatpush2.msra.mxu0 0.0
  %658 = vmatprep.subr.mxu0 0.0
  %659 = vmatpush2.msra.mxu0 0.0
  %660 = vmatprep.subr.mxu0 0.0
  %661 = vmatpush2.msra.mxu0 0.0
  %662 = vmatprep.subr.mxu0 0.0
  %663 = vmatpush2.msra.mxu0 0.0
  %664 = vmatprep.subr.mxu0 0.0
  %665 = vmatpush2.msra.mxu0 0.0
  %666 = vmatprep.subr.mxu0 0.0
  %667 = vmatpush2.msra.mxu0 0.0
  %668 = vmatprep.subr.mxu0 0.0
  %669 = vmatpush2.msra.mxu0 0.0
  %670 = vmatprep.subr.mxu0 0.0
  %671 = vmatpush2.msra.mxu0 0.0
  %672 = vmatprep.subr.mxu0 0.0
  %673 = vmatpush2.msra.mxu0 0.0
  %674 = vmatprep.subr.mxu0 0.0
  %675 = vmatpush2.msra.mxu0 0.0
  %676 = vmatprep.subr.mxu0 0.0
  %677 = vmatpush2.msra.mxu0 0.0
  %678 = vmatprep.subr.mxu0 0.0
  %679 = vmatpush2.msra.mxu0 0.0
  %680 = vmatprep.mubr.f32.mxu0 0.0
  %681 = vmatmul.mubr.f32.gmra.mxu0 %v614
  %v682 = vpop.f32.mrf.mxu0
  %v683 = vadd.f32 0.0, %v682
  %v684 = vpop.f32.mrf.mxu0
  %685 = vdwg.mxu0
  %v686 = vmul.f32 %v683, 0.001953125
  %v687 = vadd.f32 %v686, 1e-05
  %v688 = vrsqrt.pop %v687
  %v689 = vmul.f32 %v688, %v48
  %v690 = vlaneseq
  %v691 = vshrl.u32 %v690, 7
  %v692 = vsub.s32 0, %v691
  %v693 = vrot.slane %v689, %v692
  %v694 = vmul.f32 %v592, %v693
  %v695 = vmul.f32 %v593, %v693
  %v696 = vmul.f32 %v594, %v693
  %v697 = vmul.f32 %v595, %v693
  %v699 = vlaneseq
  %v700 = vshrl.u32 %v699, 7
  %v701 = vsub.s32 0, %v700
  %v702 = vrot.slane %v49, %v701
  %v704 = vadd.f32 %v694, %v702
  %v705 = vadd.f32 %v695, %v702
  %v706 = vadd.f32 %v696, %v702
  %v707 = vadd.f32 %v697, %v702
  %v708 = vmax.f32 %v704, 0.0
  %v709 = vmax.f32 %v705, 0.0
  %v710 = vmax.f32 %v706, 0.0
  %v711 = vmax.f32 %v707, 0.0
  %v712 = vld [vmem:[%s7] sm:$0x1]
  %v713 = vld [vmem:[%s8] sm:$0x1]
  %v714 = vld [vmem:[%s9] sm:$0x1]
  %v717 = vrot.slane %v708, 1
  %v718 = vrot.slane %v710, 1
  %v723 = vrot.slane %v708, 7
  %v724 = vrot.slane %v709, 7
  %v725 = vsel %vm58, %v723, %v724
  %v726 = vrot.slane %v710, 7
  %v727 = vrot.slane %v711, 7
  %v728 = vsel %vm58, %v726, %v727
  %v733 = vrot.slane %v709, 5
  %v734 = vrot.slane %v711, 5
  %v737 = vsel %vm58, %v717, %v723
  %v738 = vsel %vm58, %v718, %v726
  %v739 = vsel %vm58, %v724, %v733
  %v740 = vsel %vm58, %v727, %v734
  %745 = vrot.lane.b32.xlu0 %v737, 124
  %v746 = vpop.permute.xlu0 %745
  %747 = vrot.lane.b32.xlu0 %v725, 124
  %v748 = vpop.permute.xlu0 %747
  %749 = vrot.lane.b32.xlu0 %v739, 124
  %v750 = vpop.permute.xlu0 %749
  %751 = vrot.lane.b32.xlu0 %v738, 124
  %v752 = vpop.permute.xlu0 %751
  %753 = vrot.lane.b32.xlu0 %v728, 124
  %v754 = vpop.permute.xlu0 %753
  %755 = vrot.lane.b32.xlu0 %v740, 124
  %v756 = vpop.permute.xlu0 %755
  %763 = vrot.lane.b32.xlu0 %v737, 4
  %v764 = vpop.permute.xlu0 %763
  %765 = vrot.lane.b32.xlu0 %v725, 4
  %v766 = vpop.permute.xlu0 %765
  %767 = vrot.lane.b32.xlu0 %v739, 4
  %v768 = vpop.permute.xlu0 %767
  %769 = vrot.lane.b32.xlu0 %v738, 4
  %v770 = vpop.permute.xlu0 %769
  %771 = vrot.lane.b32.xlu0 %v728, 4
  %v772 = vpop.permute.xlu0 %771
  %773 = vrot.lane.b32.xlu0 %v740, 4
  %v774 = vpop.permute.xlu0 %773
  %781 = vrot.lane.b32.xlu0 %v737, 12
  %v782 = vpop.permute.xlu0 %781
  %783 = vrot.lane.b32.xlu0 %v725, 12
  %v784 = vpop.permute.xlu0 %783
  %785 = vrot.lane.b32.xlu0 %v739, 12
  %v786 = vpop.permute.xlu0 %785
  %787 = vrot.lane.b32.xlu0 %v738, 12
  %v788 = vpop.permute.xlu0 %787
  %789 = vrot.lane.b32.xlu0 %v728, 12
  %v790 = vpop.permute.xlu0 %789
  %791 = vrot.lane.b32.xlu0 %v740, 12
  %v792 = vpop.permute.xlu0 %791
  %v799 = vsel %vm135, %v746, %v764
  %v800 = vsel %vm135, %v748, %v766
  %v801 = vsel %vm135, %v750, %v768
  %v802 = vsel %vm135, %v752, %v770
  %v803 = vsel %vm135, %v754, %v772
  %v804 = vsel %vm135, %v756, %v774
  %v805 = vsel %vm142, %v799, %v782
  %v806 = vsel %vm142, %v800, %v784
  %v807 = vsel %vm142, %v801, %v786
  %v808 = vsel %vm142, %v802, %v788
  %v809 = vsel %vm142, %v803, %v790
  %v810 = vsel %vm142, %v804, %v792
  %v811 = vld [vmem:[%s2] sm:$0xff]
  %v812 = vld [vmem:[%s2 + $0x8] sm:$0xff]
  %v813 = vld [vmem:[%s2 + $0x10] sm:$0xff]
  %v814 = vld [vmem:[%s2 + $0x18] sm:$0xff]
  %v815 = vld [vmem:[%s2 + $0x20] sm:$0xff]
  %v816 = vld [vmem:[%s2 + $0x28] sm:$0xff]
  %v817 = vld [vmem:[%s2 + $0x30] sm:$0xff]
  %v818 = vld [vmem:[%s2 + $0x38] sm:$0xff]
  %v819 = vld [vmem:[%s2 + $0x40] sm:$0xff]
  %v826 = vrot.slane %v805, 1
  %v827 = vrot.slane %v806, 1
  %v828 = vsel %vm164, %v826, %v827
  %v829 = vrot.slane %v807, 1
  %v830 = vsel %vm164, %v827, %v829
  %v831 = vrot.slane %v808, 1
  %v832 = vrot.slane %v809, 1
  %v833 = vsel %vm164, %v831, %v832
  %v834 = vrot.slane %v810, 1
  %v835 = vsel %vm164, %v832, %v834
  %s836 = scalar_lea.vmem %s2, 72
  %v837 = vld [vmem:[%s836] sm:$0xff]
  %v838 = vld [vmem:[%s836 + $0x8] sm:$0xff]
  %v839 = vld [vmem:[%s836 + $0x10] sm:$0xff]
  %v840 = vld [vmem:[%s836 + $0x18] sm:$0xff]
  %v841 = vld [vmem:[%s836 + $0x20] sm:$0xff]
  %v842 = vld [vmem:[%s836 + $0x28] sm:$0xff]
  %v843 = vld [vmem:[%s836 + $0x30] sm:$0xff]
  %v844 = vld [vmem:[%s836 + $0x38] sm:$0xff]
  %v845 = vld [vmem:[%s836 + $0x40] sm:$0xff]
  %v846 = vsel %vm185, %v828, 0
  %v848 = vsel %vm185, %v830, 0
  %v850 = vsel %vm185, %v833, 0
  %v852 = vsel %vm185, %v835, 0
  %854 = vmatprep.subr.mxu0 0.0
  %855 = vmatpush1.msra.mxu0 0.0
  %856 = vmatprep.subr.mxu0 0.0
  %857 = vmatpush1.msra.mxu0 0.0
  %858 = vmatprep.subr.mxu0 0.0
  %859 = vmatpush1.msra.mxu0 0.0
  %860 = vmatprep.subr.mxu0 0.0
  %861 = vmatpush1.msra.mxu0 0.0
  %862 = vmatprep.subr.mxu0 0.0
  %863 = vmatpush1.msra.mxu0 0.0
  %864 = vmatprep.subr.mxu0 0.0
  %865 = vmatpush1.msra.mxu0 0.0
  %866 = vmatprep.subr.mxu0 0.0
  %867 = vmatpush1.msra.mxu0 0.0
  %868 = vmatprep.subr.mxu0 0.0
  %869 = vmatpush1.msra.mxu0 %v845
  %870 = vmatprep.subr.mxu0 0.0
  %871 = vmatpush1.msra.mxu0 %v844
  %872 = vmatprep.subr.mxu0 0.0
  %873 = vmatpush1.msra.mxu0 %v843
  %874 = vmatprep.subr.mxu0 0.0
  %875 = vmatpush1.msra.mxu0 %v842
  %876 = vmatprep.subr.mxu0 0.0
  %877 = vmatpush1.msra.mxu0 %v841
  %878 = vmatprep.subr.mxu0 0.0
  %879 = vmatpush1.msra.mxu0 %v840
  %880 = vmatprep.subr.mxu0 0.0
  %881 = vmatpush1.msra.mxu0 %v839
  %882 = vmatprep.subr.mxu0 0.0
  %883 = vmatpush1.msra.mxu0 %v838
  %884 = vmatprep.subr.mxu0 0.0
  %885 = vmatpush1.msra.mxu0 %v837
  %886 = vmatprep.subr.mxu0 0.0
  %887 = vmatpush2.msra.mxu0 0.0
  %888 = vmatprep.subr.mxu0 0.0
  %889 = vmatpush2.msra.mxu0 0.0
  %890 = vmatprep.subr.mxu0 0.0
  %891 = vmatpush2.msra.mxu0 0.0
  %892 = vmatprep.subr.mxu0 0.0
  %893 = vmatpush2.msra.mxu0 0.0
  %894 = vmatprep.subr.mxu0 0.0
  %895 = vmatpush2.msra.mxu0 0.0
  %896 = vmatprep.subr.mxu0 0.0
  %897 = vmatpush2.msra.mxu0 0.0
  %898 = vmatprep.subr.mxu0 0.0
  %899 = vmatpush2.msra.mxu0 0.0
  %900 = vmatprep.subr.mxu0 0.0
  %901 = vmatpush2.msra.mxu0 0.0
  %902 = vmatprep.subr.mxu0 0.0
  %903 = vmatpush2.msra.mxu0 0.0
  %904 = vmatprep.subr.mxu0 0.0
  %905 = vmatpush2.msra.mxu0 0.0
  %906 = vmatprep.subr.mxu0 0.0
  %907 = vmatpush2.msra.mxu0 0.0
  %908 = vmatprep.subr.mxu0 0.0
  %909 = vmatpush2.msra.mxu0 0.0
  %910 = vmatprep.subr.mxu0 0.0
  %911 = vmatpush2.msra.mxu0 0.0
  %912 = vmatprep.subr.mxu0 0.0
  %913 = vmatpush2.msra.mxu0 0.0
  %914 = vmatprep.subr.mxu0 0.0
  %915 = vmatpush2.msra.mxu0 0.0
  %916 = vmatprep.subr.mxu0 0.0
  %917 = vmatpush2.msra.mxu0 0.0
  %918 = vmatprep.mubr.f32.mxu0 0.0
  %919 = vmatmul.mubr.f32.gmra.mxu0 %v846
  %v920 = vpop.f32.mrf.mxu0
  %v921 = vadd.f32 0.0, %v920
  %v922 = vpop.f32.mrf.mxu0
  %923 = vmatprep.mubr.f32.mxu0 0.0
  %924 = vmatmul.mubr.f32.gmra.mxu0 %v848
  %v925 = vpop.f32.mrf.mxu0
  %v926 = vadd.f32 0.0, %v925
  %v927 = vpop.f32.mrf.mxu0
  %928 = vmatprep.mubr.f32.mxu0 0.0
  %929 = vmatmul.mubr.f32.gmra.mxu0 %v850
  %v930 = vpop.f32.mrf.mxu0
  %v931 = vadd.f32 0.0, %v930
  %v932 = vpop.f32.mrf.mxu0
  %933 = vmatprep.mubr.f32.mxu0 0.0
  %934 = vmatmul.mubr.f32.gmra.mxu0 %v852
  %v935 = vpop.f32.mrf.mxu0
  %v936 = vadd.f32 0.0, %v935
  %v937 = vpop.f32.mrf.mxu0
  %938 = vdwg.mxu0
  %v939 = vsel %vm185, %v805, 0
  %v941 = vsel %vm185, %v806, 0
  %v943 = vsel %vm185, %v808, 0
  %v945 = vsel %vm185, %v809, 0
  %947 = vmatprep.subr.mxu0 0.0
  %948 = vmatpush1.msra.mxu0 0.0
  %949 = vmatprep.subr.mxu0 0.0
  %950 = vmatpush1.msra.mxu0 0.0
  %951 = vmatprep.subr.mxu0 0.0
  %952 = vmatpush1.msra.mxu0 0.0
  %953 = vmatprep.subr.mxu0 0.0
  %954 = vmatpush1.msra.mxu0 0.0
  %955 = vmatprep.subr.mxu0 0.0
  %956 = vmatpush1.msra.mxu0 0.0
  %957 = vmatprep.subr.mxu0 0.0
  %958 = vmatpush1.msra.mxu0 0.0
  %959 = vmatprep.subr.mxu0 0.0
  %960 = vmatpush1.msra.mxu0 0.0
  %961 = vmatprep.subr.mxu0 0.0
  %962 = vmatpush1.msra.mxu0 %v819
  %963 = vmatprep.subr.mxu0 0.0
  %964 = vmatpush1.msra.mxu0 %v818
  %965 = vmatprep.subr.mxu0 0.0
  %966 = vmatpush1.msra.mxu0 %v817
  %967 = vmatprep.subr.mxu0 0.0
  %968 = vmatpush1.msra.mxu0 %v816
  %969 = vmatprep.subr.mxu0 0.0
  %970 = vmatpush1.msra.mxu0 %v815
  %971 = vmatprep.subr.mxu0 0.0
  %972 = vmatpush1.msra.mxu0 %v814
  %973 = vmatprep.subr.mxu0 0.0
  %974 = vmatpush1.msra.mxu0 %v813
  %975 = vmatprep.subr.mxu0 0.0
  %976 = vmatpush1.msra.mxu0 %v812
  %977 = vmatprep.subr.mxu0 0.0
  %978 = vmatpush1.msra.mxu0 %v811
  %979 = vmatprep.subr.mxu0 0.0
  %980 = vmatpush2.msra.mxu0 0.0
  %981 = vmatprep.subr.mxu0 0.0
  %982 = vmatpush2.msra.mxu0 0.0
  %983 = vmatprep.subr.mxu0 0.0
  %984 = vmatpush2.msra.mxu0 0.0
  %985 = vmatprep.subr.mxu0 0.0
  %986 = vmatpush2.msra.mxu0 0.0
  %987 = vmatprep.subr.mxu0 0.0
  %988 = vmatpush2.msra.mxu0 0.0
  %989 = vmatprep.subr.mxu0 0.0
  %990 = vmatpush2.msra.mxu0 0.0
  %991 = vmatprep.subr.mxu0 0.0
  %992 = vmatpush2.msra.mxu0 0.0
  %993 = vmatprep.subr.mxu0 0.0
  %994 = vmatpush2.msra.mxu0 0.0
  %995 = vmatprep.subr.mxu0 0.0
  %996 = vmatpush2.msra.mxu0 0.0
  %997 = vmatprep.subr.mxu0 0.0
  %998 = vmatpush2.msra.mxu0 0.0
  %999 = vmatprep.subr.mxu0 0.0
  %1000 = vmatpush2.msra.mxu0 0.0
  %1001 = vmatprep.subr.mxu0 0.0
  %1002 = vmatpush2.msra.mxu0 0.0
  %1003 = vmatprep.subr.mxu0 0.0
  %1004 = vmatpush2.msra.mxu0 0.0
  %1005 = vmatprep.subr.mxu0 0.0
  %1006 = vmatpush2.msra.mxu0 0.0
  %1007 = vmatprep.subr.mxu0 0.0
  %1008 = vmatpush2.msra.mxu0 0.0
  %1009 = vmatprep.subr.mxu0 0.0
  %1010 = vmatpush2.msra.mxu0 0.0
  %1011 = vmatprep.mubr.f32.mxu0 0.0
  %1012 = vmatmul.mubr.f32.gmra.mxu0 %v939
  %v1013 = vpop.f32.mrf.mxu0
  %v1014 = vadd.f32 %v921, %v1013
  %v1015 = vpop.f32.mrf.mxu0
  %1016 = vmatprep.mubr.f32.mxu0 0.0
  %1017 = vmatmul.mubr.f32.gmra.mxu0 %v941
  %v1018 = vpop.f32.mrf.mxu0
  %v1019 = vadd.f32 %v926, %v1018
  %v1020 = vpop.f32.mrf.mxu0
  %1021 = vmatprep.mubr.f32.mxu0 0.0
  %1022 = vmatmul.mubr.f32.gmra.mxu0 %v943
  %v1023 = vpop.f32.mrf.mxu0
  %v1024 = vadd.f32 %v931, %v1023
  %v1025 = vpop.f32.mrf.mxu0
  %1026 = vmatprep.mubr.f32.mxu0 0.0
  %1027 = vmatmul.mubr.f32.gmra.mxu0 %v945
  %v1028 = vpop.f32.mrf.mxu0
  %v1029 = vadd.f32 %v936, %v1028
  %v1030 = vpop.f32.mrf.mxu0
  %1031 = vdwg.mxu0
  %v1032 = vrot.slane %v805, 2
  %v1033 = vrot.slane %v806, 2
  %v1034 = vsel %vm372, %v1032, %v1033
  %v1035 = vrot.slane %v807, 2
  %v1036 = vsel %vm372, %v1033, %v1035
  %v1037 = vrot.slane %v808, 2
  %v1038 = vrot.slane %v809, 2
  %v1039 = vsel %vm372, %v1037, %v1038
  %v1040 = vrot.slane %v810, 2
  %v1041 = vsel %vm372, %v1038, %v1040
  %s1042 = scalar_lea.vmem %s2, 144
  %v1043 = vld [vmem:[%s1042] sm:$0xff]
  %v1044 = vld [vmem:[%s1042 + $0x8] sm:$0xff]
  %v1045 = vld [vmem:[%s1042 + $0x10] sm:$0xff]
  %v1046 = vld [vmem:[%s1042 + $0x18] sm:$0xff]
  %v1047 = vld [vmem:[%s1042 + $0x20] sm:$0xff]
  %v1048 = vld [vmem:[%s1042 + $0x28] sm:$0xff]
  %v1049 = vld [vmem:[%s1042 + $0x30] sm:$0xff]
  %v1050 = vld [vmem:[%s1042 + $0x38] sm:$0xff]
  %v1051 = vld [vmem:[%s1042 + $0x40] sm:$0xff]
  %v1052 = vsel %vm185, %v1034, 0
  %v1054 = vsel %vm185, %v1036, 0
  %v1056 = vsel %vm185, %v1039, 0
  %v1058 = vsel %vm185, %v1041, 0
  %1060 = vmatprep.subr.mxu0 0.0
  %1061 = vmatpush1.msra.mxu0 0.0
  %1062 = vmatprep.subr.mxu0 0.0
  %1063 = vmatpush1.msra.mxu0 0.0
  %1064 = vmatprep.subr.mxu0 0.0
  %1065 = vmatpush1.msra.mxu0 0.0
  %1066 = vmatprep.subr.mxu0 0.0
  %1067 = vmatpush1.msra.mxu0 0.0
  %1068 = vmatprep.subr.mxu0 0.0
  %1069 = vmatpush1.msra.mxu0 0.0
  %1070 = vmatprep.subr.mxu0 0.0
  %1071 = vmatpush1.msra.mxu0 0.0
  %1072 = vmatprep.subr.mxu0 0.0
  %1073 = vmatpush1.msra.mxu0 0.0
  %1074 = vmatprep.subr.mxu0 0.0
  %1075 = vmatpush1.msra.mxu0 %v1051
  %1076 = vmatprep.subr.mxu0 0.0
  %1077 = vmatpush1.msra.mxu0 %v1050
  %1078 = vmatprep.subr.mxu0 0.0
  %1079 = vmatpush1.msra.mxu0 %v1049
  %1080 = vmatprep.subr.mxu0 0.0
  %1081 = vmatpush1.msra.mxu0 %v1048
  %1082 = vmatprep.subr.mxu0 0.0
  %1083 = vmatpush1.msra.mxu0 %v1047
  %1084 = vmatprep.subr.mxu0 0.0
  %1085 = vmatpush1.msra.mxu0 %v1046
  %1086 = vmatprep.subr.mxu0 0.0
  %1087 = vmatpush1.msra.mxu0 %v1045
  %1088 = vmatprep.subr.mxu0 0.0
  %1089 = vmatpush1.msra.mxu0 %v1044
  %1090 = vmatprep.subr.mxu0 0.0
  %1091 = vmatpush1.msra.mxu0 %v1043
  %1092 = vmatprep.subr.mxu0 0.0
  %1093 = vmatpush2.msra.mxu0 0.0
  %1094 = vmatprep.subr.mxu0 0.0
  %1095 = vmatpush2.msra.mxu0 0.0
  %1096 = vmatprep.subr.mxu0 0.0
  %1097 = vmatpush2.msra.mxu0 0.0
  %1098 = vmatprep.subr.mxu0 0.0
  %1099 = vmatpush2.msra.mxu0 0.0
  %1100 = vmatprep.subr.mxu0 0.0
  %1101 = vmatpush2.msra.mxu0 0.0
  %1102 = vmatprep.subr.mxu0 0.0
  %1103 = vmatpush2.msra.mxu0 0.0
  %1104 = vmatprep.subr.mxu0 0.0
  %1105 = vmatpush2.msra.mxu0 0.0
  %1106 = vmatprep.subr.mxu0 0.0
  %1107 = vmatpush2.msra.mxu0 0.0
  %1108 = vmatprep.subr.mxu0 0.0
  %1109 = vmatpush2.msra.mxu0 0.0
  %1110 = vmatprep.subr.mxu0 0.0
  %1111 = vmatpush2.msra.mxu0 0.0
  %1112 = vmatprep.subr.mxu0 0.0
  %1113 = vmatpush2.msra.mxu0 0.0
  %1114 = vmatprep.subr.mxu0 0.0
  %1115 = vmatpush2.msra.mxu0 0.0
  %1116 = vmatprep.subr.mxu0 0.0
  %1117 = vmatpush2.msra.mxu0 0.0
  %1118 = vmatprep.subr.mxu0 0.0
  %1119 = vmatpush2.msra.mxu0 0.0
  %1120 = vmatprep.subr.mxu0 0.0
  %1121 = vmatpush2.msra.mxu0 0.0
  %1122 = vmatprep.subr.mxu0 0.0
  %1123 = vmatpush2.msra.mxu0 0.0
  %1124 = vmatprep.mubr.f32.mxu0 0.0
  %1125 = vmatmul.mubr.f32.gmra.mxu0 %v1052
  %v1126 = vpop.f32.mrf.mxu0
  %v1127 = vadd.f32 0.0, %v1126
  %v1128 = vpop.f32.mrf.mxu0
  %1129 = vmatprep.mubr.f32.mxu0 0.0
  %1130 = vmatmul.mubr.f32.gmra.mxu0 %v1054
  %v1131 = vpop.f32.mrf.mxu0
  %v1132 = vadd.f32 0.0, %v1131
  %v1133 = vpop.f32.mrf.mxu0
  %1134 = vmatprep.mubr.f32.mxu0 0.0
  %1135 = vmatmul.mubr.f32.gmra.mxu0 %v1056
  %v1136 = vpop.f32.mrf.mxu0
  %v1137 = vadd.f32 0.0, %v1136
  %v1138 = vpop.f32.mrf.mxu0
  %1139 = vmatprep.mubr.f32.mxu0 0.0
  %1140 = vmatmul.mubr.f32.gmra.mxu0 %v1058
  %v1141 = vpop.f32.mrf.mxu0
  %v1142 = vadd.f32 0.0, %v1141
  %v1143 = vpop.f32.mrf.mxu0
  %1144 = vdwg.mxu0
  %v1145 = vadd.f32 %v1014, %v1127
  %v1146 = vadd.f32 %v1019, %v1132
  %v1147 = vadd.f32 %v1024, %v1137
  %v1148 = vadd.f32 %v1029, %v1142
  %v1150 = vlaneseq
  %v1151 = vshrl.u32 %v1150, 7
  %v1152 = vsub.s32 0, %v1151
  %v1153 = vrot.slane %v712, %v1152
  %v1155 = vadd.f32 %v1145, %v1153
  %v1156 = vadd.f32 %v1146, %v1153
  %v1157 = vadd.f32 %v1147, %v1153
  %v1158 = vadd.f32 %v1148, %v1153
  %v1159 = vsel %vm500, %v1155, 0.0
  %v1160 = vsel %vm500, %v1156, 0.0
  %v1161 = vadd.f32 %v1159, %v1160
  %v1162 = vsel %vm500, %v1157, 0.0
  %v1163 = vadd.f32 %v1161, %v1162
  %v1164 = vsel %vm500, %v1158, 0.0
  %v1165 = vadd.f32 %v1163, %v1164
  %v1166 = vrot.slane %v1165, 4
  %v1167 = vadd.f32 %v1165, %v1166
  %v1168 = vrot.slane %v1167, 2
  %v1169 = vadd.f32 %v1167, %v1168
  %v1170 = vrot.slane %v1169, 1
  %v1171 = vadd.f32 %v1169, %v1170
  %v1173 = vsel %vm500, %v1171, 0
  %1175 = vmatprep.subr.mxu0 0.0
  %1176 = vmatpush1.msra.mxu0 0.0
  %1177 = vmatprep.subr.mxu0 0.0
  %1178 = vmatpush1.msra.mxu0 0.0
  %1179 = vmatprep.subr.mxu0 0.0
  %1180 = vmatpush1.msra.mxu0 0.0
  %1181 = vmatprep.subr.mxu0 0.0
  %1182 = vmatpush1.msra.mxu0 0.0
  %1183 = vmatprep.subr.mxu0 0.0
  %1184 = vmatpush1.msra.mxu0 0.0
  %1185 = vmatprep.subr.mxu0 0.0
  %1186 = vmatpush1.msra.mxu0 0.0
  %1187 = vmatprep.subr.mxu0 0.0
  %1188 = vmatpush1.msra.mxu0 0.0
  %1189 = vmatprep.subr.mxu0 0.0
  %1190 = vmatpush1.msra.mxu0 0.0
  %1191 = vmatprep.subr.mxu0 0.0
  %1192 = vmatpush1.msra.mxu0 %v46
  %1193 = vmatprep.subr.mxu0 0.0
  %1194 = vmatpush1.msra.mxu0 %v45
  %1195 = vmatprep.subr.mxu0 0.0
  %1196 = vmatpush1.msra.mxu0 %v44
  %1197 = vmatprep.subr.mxu0 0.0
  %1198 = vmatpush1.msra.mxu0 %v43
  %1199 = vmatprep.subr.mxu0 0.0
  %1200 = vmatpush1.msra.mxu0 %v42
  %1201 = vmatprep.subr.mxu0 0.0
  %1202 = vmatpush1.msra.mxu0 %v41
  %1203 = vmatprep.subr.mxu0 0.0
  %1204 = vmatpush1.msra.mxu0 %v40
  %1205 = vmatprep.subr.mxu0 0.0
  %1206 = vmatpush1.msra.mxu0 %v39
  %1207 = vmatprep.subr.mxu0 0.0
  %1208 = vmatpush2.msra.mxu0 0.0
  %1209 = vmatprep.subr.mxu0 0.0
  %1210 = vmatpush2.msra.mxu0 0.0
  %1211 = vmatprep.subr.mxu0 0.0
  %1212 = vmatpush2.msra.mxu0 0.0
  %1213 = vmatprep.subr.mxu0 0.0
  %1214 = vmatpush2.msra.mxu0 0.0
  %1215 = vmatprep.subr.mxu0 0.0
  %1216 = vmatpush2.msra.mxu0 0.0
  %1217 = vmatprep.subr.mxu0 0.0
  %1218 = vmatpush2.msra.mxu0 0.0
  %1219 = vmatprep.subr.mxu0 0.0
  %1220 = vmatpush2.msra.mxu0 0.0
  %1221 = vmatprep.subr.mxu0 0.0
  %1222 = vmatpush2.msra.mxu0 0.0
  %1223 = vmatprep.subr.mxu0 0.0
  %1224 = vmatpush2.msra.mxu0 0.0
  %1225 = vmatprep.subr.mxu0 0.0
  %1226 = vmatpush2.msra.mxu0 0.0
  %1227 = vmatprep.subr.mxu0 0.0
  %1228 = vmatpush2.msra.mxu0 0.0
  %1229 = vmatprep.subr.mxu0 0.0
  %1230 = vmatpush2.msra.mxu0 0.0
  %1231 = vmatprep.subr.mxu0 0.0
  %1232 = vmatpush2.msra.mxu0 0.0
  %1233 = vmatprep.subr.mxu0 0.0
  %1234 = vmatpush2.msra.mxu0 0.0
  %1235 = vmatprep.subr.mxu0 0.0
  %1236 = vmatpush2.msra.mxu0 0.0
  %1237 = vmatprep.subr.mxu0 0.0
  %1238 = vmatpush2.msra.mxu0 0.0
  %1239 = vmatprep.mubr.f32.mxu0 0.0
  %1240 = vmatmul.mubr.f32.gmra.mxu0 %v1173
  %v1241 = vpop.f32.mrf.mxu0
  %v1242 = vadd.f32 0.0, %v1241
  %v1243 = vpop.f32.mrf.mxu0
  %1244 = vdwg.mxu0
  %v1245 = vmul.f32 %v1242, 0.001953125
  %v1246 = vlaneseq
  %v1247 = vshrl.u32 %v1246, 7
  %v1248 = vsub.s32 0, %v1247
  %v1249 = vrot.slane %v1245, %v1248
  %v1250 = vsub.f32 %v1155, %v1249
  %v1251 = vsub.f32 %v1156, %v1249
  %v1252 = vsub.f32 %v1157, %v1249
  %v1253 = vsub.f32 %v1158, %v1249
  %v1254 = vmul.f32 %v1250, %v1250
  %v1255 = vmul.f32 %v1251, %v1251
  %v1256 = vmul.f32 %v1252, %v1252
  %v1257 = vmul.f32 %v1253, %v1253
  %v1258 = vsel %vm500, %v1254, 0.0
  %v1259 = vsel %vm500, %v1255, 0.0
  %v1260 = vadd.f32 %v1258, %v1259
  %v1261 = vsel %vm500, %v1256, 0.0
  %v1262 = vadd.f32 %v1260, %v1261
  %v1263 = vsel %vm500, %v1257, 0.0
  %v1264 = vadd.f32 %v1262, %v1263
  %v1265 = vrot.slane %v1264, 4
  %v1266 = vadd.f32 %v1264, %v1265
  %v1267 = vrot.slane %v1266, 2
  %v1268 = vadd.f32 %v1266, %v1267
  %v1269 = vrot.slane %v1268, 1
  %v1270 = vadd.f32 %v1268, %v1269
  %v1272 = vsel %vm500, %v1270, 0
  %1274 = vmatprep.subr.mxu0 0.0
  %1275 = vmatpush1.msra.mxu0 0.0
  %1276 = vmatprep.subr.mxu0 0.0
  %1277 = vmatpush1.msra.mxu0 0.0
  %1278 = vmatprep.subr.mxu0 0.0
  %1279 = vmatpush1.msra.mxu0 0.0
  %1280 = vmatprep.subr.mxu0 0.0
  %1281 = vmatpush1.msra.mxu0 0.0
  %1282 = vmatprep.subr.mxu0 0.0
  %1283 = vmatpush1.msra.mxu0 0.0
  %1284 = vmatprep.subr.mxu0 0.0
  %1285 = vmatpush1.msra.mxu0 0.0
  %1286 = vmatprep.subr.mxu0 0.0
  %1287 = vmatpush1.msra.mxu0 0.0
  %1288 = vmatprep.subr.mxu0 0.0
  %1289 = vmatpush1.msra.mxu0 0.0
  %1290 = vmatprep.subr.mxu0 0.0
  %1291 = vmatpush1.msra.mxu0 %v46
  %1292 = vmatprep.subr.mxu0 0.0
  %1293 = vmatpush1.msra.mxu0 %v45
  %1294 = vmatprep.subr.mxu0 0.0
  %1295 = vmatpush1.msra.mxu0 %v44
  %1296 = vmatprep.subr.mxu0 0.0
  %1297 = vmatpush1.msra.mxu0 %v43
  %1298 = vmatprep.subr.mxu0 0.0
  %1299 = vmatpush1.msra.mxu0 %v42
  %1300 = vmatprep.subr.mxu0 0.0
  %1301 = vmatpush1.msra.mxu0 %v41
  %1302 = vmatprep.subr.mxu0 0.0
  %1303 = vmatpush1.msra.mxu0 %v40
  %1304 = vmatprep.subr.mxu0 0.0
  %1305 = vmatpush1.msra.mxu0 %v39
  %1306 = vmatprep.subr.mxu0 0.0
  %1307 = vmatpush2.msra.mxu0 0.0
  %1308 = vmatprep.subr.mxu0 0.0
  %1309 = vmatpush2.msra.mxu0 0.0
  %1310 = vmatprep.subr.mxu0 0.0
  %1311 = vmatpush2.msra.mxu0 0.0
  %1312 = vmatprep.subr.mxu0 0.0
  %1313 = vmatpush2.msra.mxu0 0.0
  %1314 = vmatprep.subr.mxu0 0.0
  %1315 = vmatpush2.msra.mxu0 0.0
  %1316 = vmatprep.subr.mxu0 0.0
  %1317 = vmatpush2.msra.mxu0 0.0
  %1318 = vmatprep.subr.mxu0 0.0
  %1319 = vmatpush2.msra.mxu0 0.0
  %1320 = vmatprep.subr.mxu0 0.0
  %1321 = vmatpush2.msra.mxu0 0.0
  %1322 = vmatprep.subr.mxu0 0.0
  %1323 = vmatpush2.msra.mxu0 0.0
  %1324 = vmatprep.subr.mxu0 0.0
  %1325 = vmatpush2.msra.mxu0 0.0
  %1326 = vmatprep.subr.mxu0 0.0
  %1327 = vmatpush2.msra.mxu0 0.0
  %1328 = vmatprep.subr.mxu0 0.0
  %1329 = vmatpush2.msra.mxu0 0.0
  %1330 = vmatprep.subr.mxu0 0.0
  %1331 = vmatpush2.msra.mxu0 0.0
  %1332 = vmatprep.subr.mxu0 0.0
  %1333 = vmatpush2.msra.mxu0 0.0
  %1334 = vmatprep.subr.mxu0 0.0
  %1335 = vmatpush2.msra.mxu0 0.0
  %1336 = vmatprep.subr.mxu0 0.0
  %1337 = vmatpush2.msra.mxu0 0.0
  %1338 = vmatprep.mubr.f32.mxu0 0.0
  %1339 = vmatmul.mubr.f32.gmra.mxu0 %v1272
  %v1340 = vpop.f32.mrf.mxu0
  %v1341 = vadd.f32 0.0, %v1340
  %v1342 = vpop.f32.mrf.mxu0
  %1343 = vdwg.mxu0
  %v1344 = vmul.f32 %v1341, 0.001953125
  %v1345 = vadd.f32 %v1344, 1e-05
  %v1346 = vrsqrt.pop %v1345
  %v1347 = vmul.f32 %v1346, %v713
  %v1348 = vlaneseq
  %v1349 = vshrl.u32 %v1348, 7
  %v1350 = vsub.s32 0, %v1349
  %v1351 = vrot.slane %v1347, %v1350
  %v1352 = vmul.f32 %v1250, %v1351
  %v1353 = vmul.f32 %v1251, %v1351
  %v1354 = vmul.f32 %v1252, %v1351
  %v1355 = vmul.f32 %v1253, %v1351
  %v1357 = vlaneseq
  %v1358 = vshrl.u32 %v1357, 7
  %v1359 = vsub.s32 0, %v1358
  %v1360 = vrot.slane %v714, %v1359
  %v1362 = vadd.f32 %v1352, %v1360
  %v1363 = vadd.f32 %v1353, %v1360
  %v1364 = vadd.f32 %v1354, %v1360
  %v1365 = vadd.f32 %v1355, %v1360
  %v1366 = vadd.f32 %v1362, %v35
  %v1367 = vadd.f32 %v1363, %v36
  %v1368 = vadd.f32 %v1364, %v37
  %v1369 = vadd.f32 %v1365, %v38
  %1370 = vst.msk [vmem:[%s10] sm:$0xff] %vm500, %v1366
  %1371 = vst.msk [vmem:[%s10 + $0x8] sm:$0xff] %vm500, %v1367
  %1372 = vst.msk [vmem:[%s10 + $0x10] sm:$0xff] %vm500, %v1368
  %1373 = vst.msk [vmem:[%s10 + $0x18] sm:$0xff] %vm500, %v1369
  // Predicated region
  $region42: #{residual_layer_forward.1} parent=0 // pred_check
    _
  $region43: #{residual_layer_forward.1} parent=0 // pred_check_branch
    %1375 = sbr.rel (0) target = $region45
  $region44: #{residual_layer_forward.1} parent=0 // pred_region
    _
  $region45: #{residual_layer_forward.1} parent=0 // pred_fallthru
    _
  // Predicated region
  $region46: #{residual_layer_forward.1} parent=0 // pred_check
    _
  $region47: #{residual_layer_forward.1} parent=0 // pred_check_branch
    %1377 = sbr.rel (0) target = $region49
  $region48: #{residual_layer_forward.1} parent=0 // pred_region
    _
  $region49: #{residual_layer_forward.1} parent=0 // pred_fallthru
    _

</llo_original>
